<compile_context>
chip_gen: v7x
topology: tpu7x:2x2x1
jax: 0.10.0
libtpu: 0.0.40
codegen_flags: <defaults>
</compile_context>

<pallas_src>
import numpy as np
import jax
import jax.numpy as jnp
from jax import lax
from jax.experimental import pallas as pl
from jax.experimental.pallas import tpu as pltpu

# ---- architecture (mlp_q_dims=[N+E1,H,L], p1=[E1+L,H,Z1], p2=[L,Z2], p3=[Z1+Z2,N]) ----
N_ITEMS = 256
E1_SIZE = 128
HIDDEN = 128
LATENT = 64     # mlp_q_dims[-1]
Z1_DIM = 64     # mlp_p1_dims[-1]
Z2_DIM = 64     # mlp_p2_dims[-1]
MAX_BATCH_TILE = 256   # fills v6e/v7x 256-row MXU; multiple of 128 for v5e
REGS = 0.0


def _cor_kernel(d_ref, e1_ref,
                wq1d_ref, wq1e_ref, bq1_ref, wq2_ref, bq2_ref,
                wp1e_ref, wp1z_ref, bp1a_ref, wp1b_ref, bp1b_ref,
                wp2_ref, bp2_ref,
                wp3a_ref, wp3b_ref, bp3_ref,
                scores_ref, mulogvar_ref):
    cdt = wq2_ref.dtype  # MXU operand dtype (f32 or bf16); accumulation stays f32

    d = d_ref[...].astype(jnp.float32)
    # F.normalize(D, dim=1): x / max(||x||, 1e-12)  ==  x * rsqrt(max(sumsq, 1e-24))
    sumsq = jnp.sum(d * d, axis=-1, keepdims=True)
    d = d * lax.rsqrt(jnp.maximum(sumsq, 1e-24))

    e1 = e1_ref[...].astype(jnp.float32)
    d_c = d.astype(cdt)
    e1_c = e1.astype(cdt)

    # ---- encoder (mlp_q): cat(D, E1) -> HIDDEN (tanh) -> 2*LATENT ----
    h = jnp.tanh(
        jnp.dot(d_c, wq1d_ref[...], preferred_element_type=jnp.float32)
        + jnp.dot(e1_c, wq1e_ref[...], preferred_element_type=jnp.float32)
        + bq1_ref[...])
    h2 = (jnp.dot(h.astype(cdt), wq2_ref[...], preferred_element_type=jnp.float32)
          + bq2_ref[...])
    # Lane-dense (TILE, 2*LATENT) = (TILE, 128) store; split mu/logvar in the wrapper.
    mulogvar_ref[...] = h2

    # eval mode: E2 = reparameterize(mu, logvar) = mu.
    # No lane slice: wp1z / wp2 have zero rows for the logvar lanes, so the full
    # 128-lane h2 tile feeds the MXU directly.
    h2_c = h2.astype(cdt)

    # ---- decoder p1: cat(E1, E2) -> HIDDEN (tanh) -> Z1_mu (logvar half pruned) ----
    hp1 = jnp.tanh(
        jnp.dot(e1_c, wp1e_ref[...], preferred_element_type=jnp.float32)
        + jnp.dot(h2_c, wp1z_ref[...], preferred_element_type=jnp.float32)
        + bp1a_ref[...])
    z1 = (jnp.dot(hp1.astype(cdt), wp1b_ref[...], preferred_element_type=jnp.float32)
          + bp1b_ref[...])

    # ---- decoder p2: E2 -> Z2_mu (single layer, logvar half pruned) ----
    z2 = (jnp.dot(h2_c, wp2_ref[...], preferred_element_type=jnp.float32)
          + bp2_ref[...])

    # ---- decoder p3: cat(Z1, Z2) -> N_ITEMS (last layer: no activation) ----
    scores_ref[...] = (
        jnp.dot(z1.astype(cdt), wp3a_ref[...], preferred_element_type=jnp.float32)
        + jnp.dot(z2.astype(cdt), wp3b_ref[...], preferred_element_type=jnp.float32)
        + bp3_ref[...])


def cor_forward(D, E1, params, *, compute_dtype=jnp.float32):
    """Eval-mode COR forward.  Returns (scores, mu, logvar, reg_loss)."""
    B = D.shape[0]
    assert D.shape[1] == N_ITEMS and E1.shape[1] == E1_SIZE

    # ---- batch tiling: large tile (MXU rows), sublane-aligned, pad + slice back ----
    if B >= MAX_BATCH_TILE:
        tile = MAX_BATCH_TILE
    else:
        tile = ((B + 7) // 8) * 8        # whole batch in one grid step
    b_pad = ((B + tile - 1) // tile) * tile
    if b_pad != B:
        pad = b_pad - B
        D = jnp.pad(D, ((0, pad), (0, 0)))
        E1 = jnp.pad(E1, ((0, pad), (0, 0)))
    grid = (b_pad // tile,)

    # ---- prune never-used logvar output halves of p1's last layer and p2 ----
    wp1b = params["wp1b"][:, :Z1_DIM]
    bp1b = params["bp1b"][:, :Z1_DIM]
    wp2 = params["wp2"][:, :Z2_DIM]
    bp2 = params["bp2"][:, :Z2_DIM]

    # ---- zero-pad E2 weights to 2*LATENT input rows (logvar lanes contribute 0),
    #      so the kernel feeds the full 128-lane h2 tile with no lane slice ----
    wp1z = jnp.concatenate(
        [params["wp1z"], jnp.zeros((LATENT, HIDDEN), params["wp1z"].dtype)], axis=0)
    wp2 = jnp.concatenate(
        [wp2, jnp.zeros((LATENT, Z2_DIM), wp2.dtype)], axis=0)

    def w(x):  # matmul operands in compute_dtype (f32 default; bf16 optional)
        return x.astype(compute_dtype)

    def b(x):  # biases added post-accumulation, keep f32
        return x.astype(jnp.float32)

    weights = [
        w(params["wq1d"]), w(params["wq1e"]), b(params["bq1"]),
        w(params["wq2"]), b(params["bq2"]),
        w(params["wp1e"]), w(wp1z), b(params["bp1a"]),
        w(wp1b), b(bp1b),
        w(wp2), b(bp2),
        w(params["wp3a"]), w(params["wp3b"]), b(params["bp3"]),
    ]

    D = D.astype(compute_dtype)
    E1 = E1.astype(compute_dtype)

    def batch_spec(feat):
        return pl.BlockSpec((tile, feat), lambda i: (i, 0))

    def full_spec(arr):
        return pl.BlockSpec(arr.shape, lambda i: (0, 0))

    in_specs = ([batch_spec(N_ITEMS), batch_spec(E1_SIZE)]
                + [full_spec(x) for x in weights])
    out_specs = [batch_spec(N_ITEMS), batch_spec(2 * LATENT)]
    out_shape = [jax.ShapeDtypeStruct((b_pad, N_ITEMS), jnp.float32),
                 jax.ShapeDtypeStruct((b_pad, 2 * LATENT), jnp.float32)]

    # ---- cost estimate (helps XLA schedule the custom call) ----
    in_itemsize = jnp.dtype(compute_dtype).itemsize
    flops_per_row = 2 * (N_ITEMS * HIDDEN + E1_SIZE * HIDDEN      # q layer 0
                         + HIDDEN * 2 * LATENT                    # q layer 1
                         + E1_SIZE * HIDDEN + LATENT * HIDDEN     # p1 layer 0
                         + HIDDEN * Z1_DIM                        # p1 layer 1 (pruned)
                         + LATENT * Z2_DIM                        # p2 (pruned)
                         + Z1_DIM * N_ITEMS + Z2_DIM * N_ITEMS)   # p3
    weight_bytes = sum(int(x.size) * x.dtype.itemsize for x in weights)
    cost = pl.CostEstimate(
        flops=int(b_pad * flops_per_row),
        transcendentals=int(b_pad * (2 * HIDDEN + 1)),
        bytes_accessed=int(weight_bytes
                           + b_pad * (N_ITEMS + E1_SIZE) * in_itemsize
                           + b_pad * (N_ITEMS + 2 * LATENT) * 4))

    scores, mulogvar = pl.pallas_call(
        _cor_kernel,
        grid=grid,
        in_specs=in_specs,
        out_specs=out_specs,
        out_shape=out_shape,
        cost_estimate=cost,
        compiler_params=pltpu.CompilerParams(dimension_semantics=("parallel",)),
    )(D, E1, *weights)

    scores = scores[:B]
    mulogvar = mulogvar[:B]
    mu = mulogvar[:, :LATENT]
    logvar = mulogvar[:, LATENT:]

    # reg_loss glue (matches module.reg_loss(); regs=0 by default) — full weights.
    w_keys = ("wq1d", "wq1e", "wq2", "wp1e", "wp1z", "wp1b", "wp2", "wp3a", "wp3b")
    reg_loss = REGS * 0.5 * sum(jnp.sum(params[k].astype(jnp.float32) ** 2)
                                for k in w_keys)
    return scores, mu, logvar, reg_loss


def cor_forward_ref(D, E1, params):
    """Pure-JAX reference of the eval-mode forward (for correctness checking)."""
    d = D / jnp.maximum(jnp.linalg.norm(D, axis=1, keepdims=True), 1e-12)
    h = jnp.tanh(d @ params["wq1d"] + E1 @ params["wq1e"] + params["bq1"])
    h2 = h @ params["wq2"] + params["bq2"]
    mu, logvar = h2[:, :LATENT], h2[:, LATENT:]
    e2 = mu
    hp1 = jnp.tanh(E1 @ params["wp1e"] + e2 @ params["wp1z"] + params["bp1a"])
    z1 = (hp1 @ params["wp1b"] + params["bp1b"])[:, :Z1_DIM]
    z2 = (e2 @ params["wp2"] + params["bp2"])[:, :Z2_DIM]
    scores = z1 @ params["wp3a"] + z2 @ params["wp3b"] + params["bp3"]
    return scores, mu, logvar


def init_params(key):
    """Deterministic init matching COR.init_weights(): W ~ N(0, sqrt(2/(fi+fo))), b ~ N(0, 1e-3)."""
    def linear(k, fan_in, fan_out):
        std = (2.0 / (fan_in + fan_out)) ** 0.5
        kw, kb = jax.random.split(k)
        W = jax.random.normal(kw, (fan_in, fan_out), jnp.float32) * std
        b = jax.random.normal(kb, (1, fan_out), jnp.float32) * 0.001
        return W, b

    keys = jax.random.split(key, 6)
    Wq1, bq1 = linear(keys[0], N_ITEMS + E1_SIZE, HIDDEN)        # q layer 0
    Wq2, bq2 = linear(keys[1], HIDDEN, 2 * LATENT)               # q layer 1 (doubled)
    Wp1a, bp1a = linear(keys[2], E1_SIZE + LATENT, HIDDEN)       # p1 layer 0
    Wp1b, bp1b = linear(keys[3], HIDDEN, 2 * Z1_DIM)             # p1 layer 1 (doubled)
    Wp2, bp2 = linear(keys[4], LATENT, 2 * Z2_DIM)               # p2 layer 0 (doubled)
    Wp3, bp3 = linear(keys[5], Z1_DIM + Z2_DIM, N_ITEMS)         # p3 layer 0

    return dict(
        wq1d=Wq1[:N_ITEMS], wq1e=Wq1[N_ITEMS:], bq1=bq1,
        wq2=Wq2, bq2=bq2,
        wp1e=Wp1a[:E1_SIZE], wp1z=Wp1a[E1_SIZE:], bp1a=bp1a,
        wp1b=Wp1b, bp1b=bp1b,
        wp2=Wp2, bp2=bp2,
        wp3a=Wp3[:Z1_DIM], wp3b=Wp3[Z1_DIM:], bp3=bp3,
    )


if __name__ == "__main__":
    key = jax.random.PRNGKey(0)
    kd, ke, kp = jax.random.split(key, 3)
    B = 16
    D = jax.random.normal(kd, (B, N_ITEMS), jnp.float32)
    E1 = jax.random.normal(ke, (B, E1_SIZE), jnp.float32)
    params = init_params(kp)

    scores, mu, logvar, reg_loss = jax.jit(cor_forward)(D, E1, params)
    jax.block_until_ready((scores, mu, logvar, reg_loss))

    assert scores.shape == (B, N_ITEMS)
    assert mu.shape == (B, LATENT) and logvar.shape == (B, LATENT)
    assert jnp.all(jnp.isfinite(scores))

    # Correctness vs. a pure-JAX reference (loose tol: MXU default precision).
    ref_scores, ref_mu, ref_logvar = jax.jit(cor_forward_ref)(D, E1, params)
    np.testing.assert_allclose(np.asarray(scores), np.asarray(ref_scores),
                               rtol=3e-2, atol=3e-2)
    np.testing.assert_allclose(np.asarray(mu), np.asarray(ref_mu),
                               rtol=3e-2, atol=3e-2)
    np.testing.assert_allclose(np.asarray(logvar), np.asarray(ref_logvar),
                               rtol=3e-2, atol=3e-2)

    print("KERNEL_OK")
</pallas_src>

<mosaic_0001>
module attributes {stable_mosaic.version = 11 : i64} {
  func.func @_cor_kernel(%arg0: i32, %arg1: memref<16x256xf32, #tpu.memory_space<vmem>>, %arg2: memref<16x128xf32, #tpu.memory_space<vmem>>, %arg3: memref<256x128xf32, #tpu.memory_space<vmem>>, %arg4: memref<128x128xf32, #tpu.memory_space<vmem>>, %arg5: memref<1x128xf32, #tpu.memory_space<vmem>>, %arg6: memref<128x128xf32, #tpu.memory_space<vmem>>, %arg7: memref<1x128xf32, #tpu.memory_space<vmem>>, %arg8: memref<128x128xf32, #tpu.memory_space<vmem>>, %arg9: memref<128x128xf32, #tpu.memory_space<vmem>>, %arg10: memref<1x128xf32, #tpu.memory_space<vmem>>, %arg11: memref<128x64xf32, #tpu.memory_space<vmem>>, %arg12: memref<1x64xf32, #tpu.memory_space<vmem>>, %arg13: memref<128x64xf32, #tpu.memory_space<vmem>>, %arg14: memref<1x64xf32, #tpu.memory_space<vmem>>, %arg15: memref<64x256xf32, #tpu.memory_space<vmem>>, %arg16: memref<64x256xf32, #tpu.memory_space<vmem>>, %arg17: memref<1x256xf32, #tpu.memory_space<vmem>>, %arg18: memref<16x256xf32, #tpu.memory_space<vmem>>, %arg19: memref<16x128xf32, #tpu.memory_space<vmem>>) attributes {dimension_semantics = [#tpu.dimension_semantics<parallel>], iteration_bounds = array<i64: 1>, scalar_prefetch = 0 : i64, scratch_operands = 0 : i64, tpu.core_type = #tpu.core_type<tc>, window_params = [{transform_indices = @transform_0, window_bounds = array<i64: 16, 256>}, {transform_indices = @transform_1, window_bounds = array<i64: 16, 128>}, {pipeline_mode = #tpu.pipeline_mode<synchronous>, transform_indices = @transform_2, window_bounds = array<i64: 256, 128>}, {pipeline_mode = #tpu.pipeline_mode<synchronous>, transform_indices = @transform_3, window_bounds = array<i64: 128, 128>}, {pipeline_mode = #tpu.pipeline_mode<synchronous>, transform_indices = @transform_4, window_bounds = array<i64: 1, 128>}, {pipeline_mode = #tpu.pipeline_mode<synchronous>, transform_indices = @transform_5, window_bounds = array<i64: 128, 128>}, {pipeline_mode = #tpu.pipeline_mode<synchronous>, transform_indices = @transform_6, window_bounds = array<i64: 1, 128>}, {pipeline_mode = #tpu.pipeline_mode<synchronous>, transform_indices = @transform_7, window_bounds = array<i64: 128, 128>}, {pipeline_mode = #tpu.pipeline_mode<synchronous>, transform_indices = @transform_8, window_bounds = array<i64: 128, 128>}, {pipeline_mode = #tpu.pipeline_mode<synchronous>, transform_indices = @transform_9, window_bounds = array<i64: 1, 128>}, {pipeline_mode = #tpu.pipeline_mode<synchronous>, transform_indices = @transform_10, window_bounds = array<i64: 128, 64>}, {pipeline_mode = #tpu.pipeline_mode<synchronous>, transform_indices = @transform_11, window_bounds = array<i64: 1, 64>}, {pipeline_mode = #tpu.pipeline_mode<synchronous>, transform_indices = @transform_12, window_bounds = array<i64: 128, 64>}, {pipeline_mode = #tpu.pipeline_mode<synchronous>, transform_indices = @transform_13, window_bounds = array<i64: 1, 64>}, {pipeline_mode = #tpu.pipeline_mode<synchronous>, transform_indices = @transform_14, window_bounds = array<i64: 64, 256>}, {pipeline_mode = #tpu.pipeline_mode<synchronous>, transform_indices = @transform_15, window_bounds = array<i64: 64, 256>}, {pipeline_mode = #tpu.pipeline_mode<synchronous>, transform_indices = @transform_16, window_bounds = array<i64: 1, 256>}, {transform_indices = @transform_17, window_bounds = array<i64: 16, 256>}, {transform_indices = @transform_18, window_bounds = array<i64: 16, 128>}]} {
    %c0 = arith.constant 0 : index
    %c0_0 = arith.constant 0 : index
    %0 = vector.load %arg1[%c0, %c0_0] : memref<16x256xf32, #tpu.memory_space<vmem>>, vector<16x256xf32>
    %1 = arith.mulf %0, %0 : vector<16x256xf32>
    %cst = arith.constant dense<0.000000e+00> : vector<16xf32>
    %2 = vector.multi_reduction <add>, %1, %cst [1] : vector<16x256xf32> to vector<16xf32>
    %3 = vector.shape_cast %2 : vector<16xf32> to vector<16x1xf32>
    %cst_1 = arith.constant 1.000000e-24 : f32
    %4 = vector.broadcast %cst_1 : f32 to vector<16x1xf32>
    %5 = arith.maximumf %3, %4 : vector<16x1xf32>
    %6 = math.rsqrt %5 : vector<16x1xf32>
    %7 = vector.broadcast %6 : vector<16x1xf32> to vector<16x256xf32>
    %8 = arith.mulf %0, %7 : vector<16x256xf32>
    %c0_2 = arith.constant 0 : index
    %c0_3 = arith.constant 0 : index
    %9 = vector.load %arg2[%c0_2, %c0_3] : memref<16x128xf32, #tpu.memory_space<vmem>>, vector<16x128xf32>
    %c0_4 = arith.constant 0 : index
    %c0_5 = arith.constant 0 : index
    %10 = vector.load %arg3[%c0_4, %c0_5] : memref<256x128xf32, #tpu.memory_space<vmem>>, vector<256x128xf32>
    %cst_6 = arith.constant dense<0.000000e+00> : vector<16x128xf32>
    %11 = tpu.matmul %8, %10, %cst_6 {dimension_numbers = #tpu.dot_dimension_numbers<[1], [0], [0], [1], [0, 0, 1, 1], [], []>} : vector<16x256xf32>, vector<256x128xf32>, vector<16x128xf32> -> vector<16x128xf32>
    %c0_7 = arith.constant 0 : index
    %c0_8 = arith.constant 0 : index
    %12 = vector.load %arg4[%c0_7, %c0_8] : memref<128x128xf32, #tpu.memory_space<vmem>>, vector<128x128xf32>
    %cst_9 = arith.constant dense<0.000000e+00> : vector<16x128xf32>
    %13 = tpu.matmul %9, %12, %cst_9 {dimension_numbers = #tpu.dot_dimension_numbers<[1], [0], [0], [1], [0, 0, 1, 1], [], []>} : vector<16x128xf32>, vector<128x128xf32>, vector<16x128xf32> -> vector<16x128xf32>
    %14 = arith.addf %11, %13 : vector<16x128xf32>
    %c0_10 = arith.constant 0 : index
    %c0_11 = arith.constant 0 : index
    %15 = vector.load %arg5[%c0_10, %c0_11] : memref<1x128xf32, #tpu.memory_space<vmem>>, vector<1x128xf32>
    %16 = vector.broadcast %15 : vector<1x128xf32> to vector<16x128xf32>
    %17 = arith.addf %14, %16 : vector<16x128xf32>
    %18 = math.tanh %17 : vector<16x128xf32>
    %c0_12 = arith.constant 0 : index
    %c0_13 = arith.constant 0 : index
    %19 = vector.load %arg6[%c0_12, %c0_13] : memref<128x128xf32, #tpu.memory_space<vmem>>, vector<128x128xf32>
    %cst_14 = arith.constant dense<0.000000e+00> : vector<16x128xf32>
    %20 = tpu.matmul %18, %19, %cst_14 {dimension_numbers = #tpu.dot_dimension_numbers<[1], [0], [0], [1], [0, 0, 1, 1], [], []>} : vector<16x128xf32>, vector<128x128xf32>, vector<16x128xf32> -> vector<16x128xf32>
    %c0_15 = arith.constant 0 : index
    %c0_16 = arith.constant 0 : index
    %21 = vector.load %arg7[%c0_15, %c0_16] : memref<1x128xf32, #tpu.memory_space<vmem>>, vector<1x128xf32>
    %22 = vector.broadcast %21 : vector<1x128xf32> to vector<16x128xf32>
    %23 = arith.addf %20, %22 : vector<16x128xf32>
    %c0_17 = arith.constant 0 : index
    %c0_18 = arith.constant 0 : index
    %24 = vector.load %arg19[%c0_17, %c0_18] : memref<16x128xf32, #tpu.memory_space<vmem>>, vector<16x128xf32>
    tpu.vector_store %arg19[%c0_17, %c0_18], %23 {strides = array<i32>} : memref<16x128xf32, #tpu.memory_space<vmem>>, vector<16x128xf32>,
    %c0_19 = arith.constant 0 : index
    %c0_20 = arith.constant 0 : index
    %25 = vector.load %arg8[%c0_19, %c0_20] : memref<128x128xf32, #tpu.memory_space<vmem>>, vector<128x128xf32>
    %cst_21 = arith.constant dense<0.000000e+00> : vector<16x128xf32>
    %26 = tpu.matmul %9, %25, %cst_21 {dimension_numbers = #tpu.dot_dimension_numbers<[1], [0], [0], [1], [0, 0, 1, 1], [], []>} : vector<16x128xf32>, vector<128x128xf32>, vector<16x128xf32> -> vector<16x128xf32>
    %c0_22 = arith.constant 0 : index
    %c0_23 = arith.constant 0 : index
    %27 = vector.load %arg9[%c0_22, %c0_23] : memref<128x128xf32, #tpu.memory_space<vmem>>, vector<128x128xf32>
    %cst_24 = arith.constant dense<0.000000e+00> : vector<16x128xf32>
    %28 = tpu.matmul %23, %27, %cst_24 {dimension_numbers = #tpu.dot_dimension_numbers<[1], [0], [0], [1], [0, 0, 1, 1], [], []>} : vector<16x128xf32>, vector<128x128xf32>, vector<16x128xf32> -> vector<16x128xf32>
    %29 = arith.addf %26, %28 : vector<16x128xf32>
    %c0_25 = arith.constant 0 : index
    %c0_26 = arith.constant 0 : index
    %30 = vector.load %arg10[%c0_25, %c0_26] : memref<1x128xf32, #tpu.memory_space<vmem>>, vector<1x128xf32>
    %31 = vector.broadcast %30 : vector<1x128xf32> to vector<16x128xf32>
    %32 = arith.addf %29, %31 : vector<16x128xf32>
    %33 = math.tanh %32 : vector<16x128xf32>
    %c0_27 = arith.constant 0 : index
    %c0_28 = arith.constant 0 : index
    %34 = vector.load %arg11[%c0_27, %c0_28] : memref<128x64xf32, #tpu.memory_space<vmem>>, vector<128x64xf32>
    %cst_29 = arith.constant dense<0.000000e+00> : vector<16x64xf32>
    %35 = tpu.matmul %33, %34, %cst_29 {dimension_numbers = #tpu.dot_dimension_numbers<[1], [0], [0], [1], [0, 0, 1, 1], [], []>} : vector<16x128xf32>, vector<128x64xf32>, vector<16x64xf32> -> vector<16x64xf32>
    %c0_30 = arith.constant 0 : index
    %c0_31 = arith.constant 0 : index
    %36 = vector.load %arg12[%c0_30, %c0_31] : memref<1x64xf32, #tpu.memory_space<vmem>>, vector<1x64xf32>
    %37 = vector.broadcast %36 : vector<1x64xf32> to vector<16x64xf32>
    %38 = arith.addf %35, %37 : vector<16x64xf32>
    %c0_32 = arith.constant 0 : index
    %c0_33 = arith.constant 0 : index
    %39 = vector.load %arg13[%c0_32, %c0_33] : memref<128x64xf32, #tpu.memory_space<vmem>>, vector<128x64xf32>
    %cst_34 = arith.constant dense<0.000000e+00> : vector<16x64xf32>
    %40 = tpu.matmul %23, %39, %cst_34 {dimension_numbers = #tpu.dot_dimension_numbers<[1], [0], [0], [1], [0, 0, 1, 1], [], []>} : vector<16x128xf32>, vector<128x64xf32>, vector<16x64xf32> -> vector<16x64xf32>
    %c0_35 = arith.constant 0 : index
    %c0_36 = arith.constant 0 : index
    %41 = vector.load %arg14[%c0_35, %c0_36] : memref<1x64xf32, #tpu.memory_space<vmem>>, vector<1x64xf32>
    %42 = vector.broadcast %41 : vector<1x64xf32> to vector<16x64xf32>
    %43 = arith.addf %40, %42 : vector<16x64xf32>
    %c0_37 = arith.constant 0 : index
    %c0_38 = arith.constant 0 : index
    %44 = vector.load %arg15[%c0_37, %c0_38] : memref<64x256xf32, #tpu.memory_space<vmem>>, vector<64x256xf32>
    %cst_39 = arith.constant dense<0.000000e+00> : vector<16x256xf32>
    %45 = tpu.matmul %38, %44, %cst_39 {dimension_numbers = #tpu.dot_dimension_numbers<[1], [0], [0], [1], [0, 0, 1, 1], [], []>} : vector<16x64xf32>, vector<64x256xf32>, vector<16x256xf32> -> vector<16x256xf32>
    %c0_40 = arith.constant 0 : index
    %c0_41 = arith.constant 0 : index
    %46 = vector.load %arg16[%c0_40, %c0_41] : memref<64x256xf32, #tpu.memory_space<vmem>>, vector<64x256xf32>
    %cst_42 = arith.constant dense<0.000000e+00> : vector<16x256xf32>
    %47 = tpu.matmul %43, %46, %cst_42 {dimension_numbers = #tpu.dot_dimension_numbers<[1], [0], [0], [1], [0, 0, 1, 1], [], []>} : vector<16x64xf32>, vector<64x256xf32>, vector<16x256xf32> -> vector<16x256xf32>
    %48 = arith.addf %45, %47 : vector<16x256xf32>
    %c0_43 = arith.constant 0 : index
    %c0_44 = arith.constant 0 : index
    %49 = vector.load %arg17[%c0_43, %c0_44] : memref<1x256xf32, #tpu.memory_space<vmem>>, vector<1x256xf32>
    %50 = vector.broadcast %49 : vector<1x256xf32> to vector<16x256xf32>
    %51 = arith.addf %48, %50 : vector<16x256xf32>
    %c0_45 = arith.constant 0 : index
    %c0_46 = arith.constant 0 : index
    %52 = vector.load %arg18[%c0_45, %c0_46] : memref<16x256xf32, #tpu.memory_space<vmem>>, vector<16x256xf32>
    tpu.vector_store %arg18[%c0_45, %c0_46], %51 {strides = array<i32>} : memref<16x256xf32, #tpu.memory_space<vmem>>, vector<16x256xf32>,
    return
  }
  func.func @transform_0(%arg0: i32) -> (i32, i32) {
    %c0_i32 = arith.constant 0 : i32
    %c0_i32_0 = arith.constant 0 : i32
    return %arg0, %c0_i32 : i32, i32
  }
  func.func @transform_1(%arg0: i32) -> (i32, i32) {
    %c0_i32 = arith.constant 0 : i32
    %c0_i32_0 = arith.constant 0 : i32
    return %arg0, %c0_i32 : i32, i32
  }
  func.func @transform_2(%arg0: i32) -> (i32, i32) {
    %c0_i32 = arith.constant 0 : i32
    %c0_i32_0 = arith.constant 0 : i32
    %c0_i32_1 = arith.constant 0 : i32
    return %c0_i32, %c0_i32_0 : i32, i32
  }
  func.func @transform_3(%arg0: i32) -> (i32, i32) {
    %c0_i32 = arith.constant 0 : i32
    %c0_i32_0 = arith.constant 0 : i32
    %c0_i32_1 = arith.constant 0 : i32
    return %c0_i32, %c0_i32_0 : i32, i32
  }
  func.func @transform_4(%arg0: i32) -> (i32, i32) {
    %c0_i32 = arith.constant 0 : i32
    %c0_i32_0 = arith.constant 0 : i32
    %c0_i32_1 = arith.constant 0 : i32
    return %c0_i32, %c0_i32_0 : i32, i32
  }
  func.func @transform_5(%arg0: i32) -> (i32, i32) {
    %c0_i32 = arith.constant 0 : i32
    %c0_i32_0 = arith.constant 0 : i32
    %c0_i32_1 = arith.constant 0 : i32
    return %c0_i32, %c0_i32_0 : i32, i32
  }
  func.func @transform_6(%arg0: i32) -> (i32, i32) {
    %c0_i32 = arith.constant 0 : i32
    %c0_i32_0 = arith.constant 0 : i32
    %c0_i32_1 = arith.constant 0 : i32
    return %c0_i32, %c0_i32_0 : i32, i32
  }
  func.func @transform_7(%arg0: i32) -> (i32, i32) {
    %c0_i32 = arith.constant 0 : i32
    %c0_i32_0 = arith.constant 0 : i32
    %c0_i32_1 = arith.constant 0 : i32
    return %c0_i32, %c0_i32_0 : i32, i32
  }
  func.func @transform_8(%arg0: i32) -> (i32, i32) {
    %c0_i32 = arith.constant 0 : i32
    %c0_i32_0 = arith.constant 0 : i32
    %c0_i32_1 = arith.constant 0 : i32
    return %c0_i32, %c0_i32_0 : i32, i32
  }
  func.func @transform_9(%arg0: i32) -> (i32, i32) {
    %c0_i32 = arith.constant 0 : i32
    %c0_i32_0 = arith.constant 0 : i32
    %c0_i32_1 = arith.constant 0 : i32
    return %c0_i32, %c0_i32_0 : i32, i32
  }
  func.func @transform_10(%arg0: i32) -> (i32, i32) {
    %c0_i32 = arith.constant 0 : i32
    %c0_i32_0 = arith.constant 0 : i32
    %c0_i32_1 = arith.constant 0 : i32
    return %c0_i32, %c0_i32_0 : i32, i32
  }
  func.func @transform_11(%arg0: i32) -> (i32, i32) {
    %c0_i32 = arith.constant 0 : i32
    %c0_i32_0 = arith.constant 0 : i32
    %c0_i32_1 = arith.constant 0 : i32
    return %c0_i32, %c0_i32_0 : i32, i32
  }
  func.func @transform_12(%arg0: i32) -> (i32, i32) {
    %c0_i32 = arith.constant 0 : i32
    %c0_i32_0 = arith.constant 0 : i32
    %c0_i32_1 = arith.constant 0 : i32
    return %c0_i32, %c0_i32_0 : i32, i32
  }
  func.func @transform_13(%arg0: i32) -> (i32, i32) {
    %c0_i32 = arith.constant 0 : i32
    %c0_i32_0 = arith.constant 0 : i32
    %c0_i32_1 = arith.constant 0 : i32
    return %c0_i32, %c0_i32_0 : i32, i32
  }
  func.func @transform_14(%arg0: i32) -> (i32, i32) {
    %c0_i32 = arith.constant 0 : i32
    %c0_i32_0 = arith.constant 0 : i32
    %c0_i32_1 = arith.constant 0 : i32
    return %c0_i32, %c0_i32_0 : i32, i32
  }
  func.func @transform_15(%arg0: i32) -> (i32, i32) {
    %c0_i32 = arith.constant 0 : i32
    %c0_i32_0 = arith.constant 0 : i32
    %c0_i32_1 = arith.constant 0 : i32
    return %c0_i32, %c0_i32_0 : i32, i32
  }
  func.func @transform_16(%arg0: i32) -> (i32, i32) {
    %c0_i32 = arith.constant 0 : i32
    %c0_i32_0 = arith.constant 0 : i32
    %c0_i32_1 = arith.constant 0 : i32
    return %c0_i32, %c0_i32_0 : i32, i32
  }
  func.func @transform_17(%arg0: i32) -> (i32, i32) {
    %c0_i32 = arith.constant 0 : i32
    %c0_i32_0 = arith.constant 0 : i32
    return %arg0, %c0_i32 : i32, i32
  }
  func.func @transform_18(%arg0: i32) -> (i32, i32) {
    %c0_i32 = arith.constant 0 : i32
    %c0_i32_0 = arith.constant 0 : i32
    return %arg0, %c0_i32 : i32, i32
  }
}

</mosaic_0001>

<llo_original>
// kernel: cor_forward.1
$region0: #{cor_forward.1}
  #allocation0 [shape = 'u32[]', space=smem, size = 0x4, offset = 0x4, fixed_abs, tag = 'smem constant byte address 0x4 - core index']
  #allocation1 [shape = 'u32[144,128]{1,0:T(1,128)}', space=vmem, size = 0x12000, scoped, tag = 'internal scratch']
  %s0 = inlined_call_operand.hbm [shape: f32[16,256], index: 0, kind: input, shape index: {}]
  %s1 = inlined_call_operand.hbm [shape: f32[16,128], index: 1, kind: input, shape index: {}]
  %s2 = inlined_call_operand.vmem [shape: f32[256,128], index: 2, kind: input, shape index: {}]
  %s3 = inlined_call_operand.vmem [shape: f32[128,128], index: 3, kind: input, shape index: {}]
  %s4 = inlined_call_operand.hbm [shape: f32[1,128], index: 4, kind: input, shape index: {}]
  %s5 = inlined_call_operand.hbm [shape: f32[128,128], index: 5, kind: input, shape index: {}]
  %s6 = inlined_call_operand.hbm [shape: f32[1,128], index: 6, kind: input, shape index: {}]
  %s7 = inlined_call_operand.hbm [shape: f32[128,128], index: 7, kind: input, shape index: {}]
  %s8 = inlined_call_operand.vmem [shape: f32[128,128], index: 8, kind: input, shape index: {}]
  %s9 = inlined_call_operand.hbm [shape: f32[1,128], index: 9, kind: input, shape index: {}]
  %s10 = inlined_call_operand.hbm [shape: f32[128,64], index: 10, kind: input, shape index: {}]
  %s11 = inlined_call_operand.hbm [shape: f32[1,64], index: 11, kind: input, shape index: {}]
  %s12 = inlined_call_operand.vmem [shape: f32[128,64], index: 12, kind: input, shape index: {}]
  %s13 = inlined_call_operand.hbm [shape: f32[1,64], index: 13, kind: input, shape index: {}]
  %s14 = inlined_call_operand.hbm [shape: f32[64,256], index: 14, kind: input, shape index: {}]
  %s15 = inlined_call_operand.hbm [shape: f32[64,256], index: 15, kind: input, shape index: {}]
  %s16 = inlined_call_operand.vmem [shape: f32[1,256], index: 16, kind: input, shape index: {}]
  %s17 = inlined_call_operand.hbm [shape: f32[16,256], index: 17, kind: output, shape index: {0}]
  %s18 = inlined_call_operand.vmem [shape: f32[16,128], index: 18, kind: output, shape index: {1}]
  %19 = xla_tuple %s17, %s18
  %s20 = sld [smem:[#allocation0]]
  $region134: #{cor_forward.1} parent=0
    _
  %s22 = ssub.s32 1, %s20
  %s23 = scalar_select 0, %s22, %s20
  $region1: #{cor_forward.1} parent=0
    #allocation2 [shape = 'u8[16384]{0}', space=vmem, size = 0x4000, scoped, tag = 'input window, operand 0, single buffered']
    #allocation3 [shape = 's32[1]{0}', space=sflag, size = 0x4, scoped, tag = 'scoped memory for cor_forward.1']
    #allocation4 [shape = 's32[1]{0}', space=sflag, size = 0x4, scoped, tag = 'scoped memory for cor_forward.1']
    #allocation5 [shape = 'u8[8192]{0}', space=vmem, size = 0x2000, scoped, tag = 'input window, operand 1, single buffered']
    #allocation6 [shape = 's32[1]{0}', space=sflag, size = 0x4, scoped, tag = 'scoped memory for cor_forward.1']
    #allocation7 [shape = 'u8[512]{0}', space=vmem, size = 0x400, scoped, tag = 'input window, operand 4, single buffered']
    #allocation8 [shape = 'u8[65536]{0}', space=vmem, size = 0x10000, scoped, tag = 'input window, operand 5, single buffered']
    #allocation9 [shape = 's32[1]{0}', space=sflag, size = 0x4, scoped, tag = 'scoped memory for cor_forward.1']
    #allocation10 [shape = 'u8[512]{0}', space=vmem, size = 0x400, scoped, tag = 'input window, operand 6, single buffered']
    #allocation11 [shape = 'u8[65536]{0}', space=vmem, size = 0x10000, scoped, tag = 'input window, operand 7, single buffered']
    #allocation12 [shape = 's32[1]{0}', space=sflag, size = 0x4, scoped, tag = 'scoped memory for cor_forward.1']
    #allocation13 [shape = 'u8[512]{0}', space=vmem, size = 0x400, scoped, tag = 'input window, operand 9, single buffered']
    #allocation14 [shape = 'u8[65536]{0}', space=vmem, size = 0x10000, scoped, tag = 'input window, operand 10, single buffered']
    #allocation15 [shape = 's32[1]{0}', space=sflag, size = 0x4, scoped, tag = 'scoped memory for cor_forward.1']
    #allocation16 [shape = 'u8[512]{0}', space=vmem, size = 0x400, scoped, tag = 'input window, operand 11, single buffered']
    #allocation17 [shape = 'u8[512]{0}', space=vmem, size = 0x400, scoped, tag = 'input window, operand 13, single buffered']
    #allocation18 [shape = 's32[1]{0}', space=sflag, size = 0x4, scoped, tag = 'scoped memory for cor_forward.1']
    #allocation19 [shape = 'u8[65536]{0}', space=vmem, size = 0x10000, scoped, tag = 'input window, operand 14, single buffered']
    #allocation20 [shape = 'u8[65536]{0}', space=vmem, size = 0x10000, scoped, tag = 'input window, operand 15, single buffered']
    #allocation21 [shape = 's32[1]{0}', space=sflag, size = 0x4, scoped, tag = 'scoped memory for cor_forward.1']
    #allocation22 [shape = 'u8[16384]{0}', space=vmem, size = 0x4000, scoped, tag = 'output window, operand 0, single buffered']
    %24 = vsyncpa [#allocation3], 0
    %25 = vsyncpa [#allocation6], 0
    %26 = vsyncpa [#allocation9], 0
    %27 = vsyncpa [#allocation12], 0
    %28 = vsyncpa [#allocation15], 0
    %29 = vsyncpa [#allocation18], 0
    %30 = vsyncpa [#allocation21], 0
    %31 = vsyncpa [#allocation4], 0
    // Predicated region
    $region2: #{cor_forward.1} parent=1 // pred_check
      _
    $region3: #{cor_forward.1} parent=1 // pred_check_branch
      %33 = sbr.rel (0) target = $region5
    $region4: #{cor_forward.1} parent=1 // pred_region
      %s35 = ssub.s32 512, 512
      %36 = vsyncadd [#allocation3], %s35
      %s37 = sshll.u32 [#allocation2], 4
      %s38 = int_to_ptr.vmem [resolvable:$true] %s37
      %43 = dma.hbm_to_vmem [thread:$0]  %s0, 512, %s38, [#allocation3], 256, 256, 16
    $region5: #{cor_forward.1} parent=1 // pred_fallthru
      _
    // Predicated region
    $region6: #{cor_forward.1} parent=1 // pred_check
      _
    $region7: #{cor_forward.1} parent=1 // pred_check_branch
      %45 = sbr.rel (0) target = $region9
    $region8: #{cor_forward.1} parent=1 // pred_region
      %s47 = ssub.s32 256, 256
      %48 = vsyncadd [#allocation6], %s47
      %s49 = sshll.u32 [#allocation5], 4
      %s50 = int_to_ptr.vmem [resolvable:$true] %s49
      %55 = dma.hbm_to_vmem [thread:$0]  %s1, 256, %s50, [#allocation6], 128, 128, 8
    $region9: #{cor_forward.1} parent=1 // pred_fallthru
      _
    // Predicated region
    $region10: #{cor_forward.1} parent=1 // pred_check
      _
    $region11: #{cor_forward.1} parent=1 // pred_check_branch
      %57 = sbr.rel (0) target = $region13
    $region12: #{cor_forward.1} parent=1 // pred_region
      _
    $region13: #{cor_forward.1} parent=1 // pred_fallthru
      _
    // Predicated region
    $region14: #{cor_forward.1} parent=1 // pred_check
      _
    $region15: #{cor_forward.1} parent=1 // pred_check_branch
      %59 = sbr.rel (0) target = $region17
    $region16: #{cor_forward.1} parent=1 // pred_region
      _
    $region17: #{cor_forward.1} parent=1 // pred_fallthru
      _
    // Predicated region
    $region18: #{cor_forward.1} parent=1 // pred_check
      _
    $region19: #{cor_forward.1} parent=1 // pred_check_branch
      %61 = sbr.rel (0) target = $region21
    $region20: #{cor_forward.1} parent=1 // pred_region
      %s63 = ssub.s32 16, 16
      %64 = vsyncadd [#allocation6], %s63
      %s66 = sshll.u32 [#allocation7], 4
      %s67 = int_to_ptr.vmem [resolvable:$true] %s66
      %69 = dma.hbm_to_vmem [thread:$0]  %s4, 16, %s67, [#allocation6]
    $region21: #{cor_forward.1} parent=1 // pred_fallthru
      _
    // Predicated region
    $region22: #{cor_forward.1} parent=1 // pred_check
      _
    $region23: #{cor_forward.1} parent=1 // pred_check_branch
      %71 = sbr.rel (0) target = $region25
    $region24: #{cor_forward.1} parent=1 // pred_region
      %s73 = ssub.s32 2048, 2048
      %74 = vsyncadd [#allocation9], %s73
      %s75 = sshll.u32 [#allocation8], 4
      %s76 = int_to_ptr.vmem [resolvable:$true] %s75
      %81 = dma.hbm_to_vmem [thread:$0]  %s5, 2048, %s76, [#allocation9], 128, 128, 8
    $region25: #{cor_forward.1} parent=1 // pred_fallthru
      _
    // Predicated region
    $region26: #{cor_forward.1} parent=1 // pred_check
      _
    $region27: #{cor_forward.1} parent=1 // pred_check_branch
      %83 = sbr.rel (0) target = $region29
    $region28: #{cor_forward.1} parent=1 // pred_region
      %s85 = ssub.s32 16, 16
      %86 = vsyncadd [#allocation9], %s85
      %s88 = sshll.u32 [#allocation10], 4
      %s89 = int_to_ptr.vmem [resolvable:$true] %s88
      %91 = dma.hbm_to_vmem [thread:$0]  %s6, 16, %s89, [#allocation9]
    $region29: #{cor_forward.1} parent=1 // pred_fallthru
      _
    // Predicated region
    $region30: #{cor_forward.1} parent=1 // pred_check
      _
    $region31: #{cor_forward.1} parent=1 // pred_check_branch
      %93 = sbr.rel (0) target = $region33
    $region32: #{cor_forward.1} parent=1 // pred_region
      %s95 = ssub.s32 2048, 2048
      %96 = vsyncadd [#allocation12], %s95
      %s97 = sshll.u32 [#allocation11], 4
      %s98 = int_to_ptr.vmem [resolvable:$true] %s97
      %103 = dma.hbm_to_vmem [thread:$0]  %s7, 2048, %s98, [#allocation12], 128, 128, 8
    $region33: #{cor_forward.1} parent=1 // pred_fallthru
      _
    // Predicated region
    $region34: #{cor_forward.1} parent=1 // pred_check
      _
    $region35: #{cor_forward.1} parent=1 // pred_check_branch
      %105 = sbr.rel (0) target = $region37
    $region36: #{cor_forward.1} parent=1 // pred_region
      _
    $region37: #{cor_forward.1} parent=1 // pred_fallthru
      _
    // Predicated region
    $region38: #{cor_forward.1} parent=1 // pred_check
      _
    $region39: #{cor_forward.1} parent=1 // pred_check_branch
      %107 = sbr.rel (0) target = $region41
    $region40: #{cor_forward.1} parent=1 // pred_region
      %s109 = ssub.s32 16, 16
      %110 = vsyncadd [#allocation12], %s109
      %s112 = sshll.u32 [#allocation13], 4
      %s113 = int_to_ptr.vmem [resolvable:$true] %s112
      %115 = dma.hbm_to_vmem [thread:$0]  %s9, 16, %s113, [#allocation12]
    $region41: #{cor_forward.1} parent=1 // pred_fallthru
      _
    // Predicated region
    $region42: #{cor_forward.1} parent=1 // pred_check
      _
    $region43: #{cor_forward.1} parent=1 // pred_check_branch
      %117 = sbr.rel (0) target = $region45
    $region44: #{cor_forward.1} parent=1 // pred_region
      %s119 = ssub.s32 2048, 2048
      %120 = vsyncadd [#allocation15], %s119
      %s121 = sshll.u32 [#allocation14], 4
      %s122 = int_to_ptr.vmem [resolvable:$true] %s121
      %127 = dma.hbm_to_vmem [thread:$0]  %s10, 2048, %s122, [#allocation15], 128, 128, 8
    $region45: #{cor_forward.1} parent=1 // pred_fallthru
      _
    // Predicated region
    $region46: #{cor_forward.1} parent=1 // pred_check
      _
    $region47: #{cor_forward.1} parent=1 // pred_check_branch
      %129 = sbr.rel (0) target = $region49
    $region48: #{cor_forward.1} parent=1 // pred_region
      %s131 = ssub.s32 16, 16
      %132 = vsyncadd [#allocation15], %s131
      %s134 = sshll.u32 [#allocation16], 4
      %s135 = int_to_ptr.vmem [resolvable:$true] %s134
      %137 = dma.hbm_to_vmem [thread:$0]  %s11, 16, %s135, [#allocation15]
    $region49: #{cor_forward.1} parent=1 // pred_fallthru
      _
    // Predicated region
    $region50: #{cor_forward.1} parent=1 // pred_check
      _
    $region51: #{cor_forward.1} parent=1 // pred_check_branch
      %139 = sbr.rel (0) target = $region53
    $region52: #{cor_forward.1} parent=1 // pred_region
      _
    $region53: #{cor_forward.1} parent=1 // pred_fallthru
      _
    // Predicated region
    $region54: #{cor_forward.1} parent=1 // pred_check
      _
    $region55: #{cor_forward.1} parent=1 // pred_check_branch
      %141 = sbr.rel (0) target = $region57
    $region56: #{cor_forward.1} parent=1 // pred_region
      %s143 = ssub.s32 16, 16
      %144 = vsyncadd [#allocation18], %s143
      %s146 = sshll.u32 [#allocation17], 4
      %s147 = int_to_ptr.vmem [resolvable:$true] %s146
      %149 = dma.hbm_to_vmem [thread:$0]  %s13, 16, %s147, [#allocation18]
    $region57: #{cor_forward.1} parent=1 // pred_fallthru
      _
    // Predicated region
    $region58: #{cor_forward.1} parent=1 // pred_check
      _
    $region59: #{cor_forward.1} parent=1 // pred_check_branch
      %151 = sbr.rel (0) target = $region61
    $region60: #{cor_forward.1} parent=1 // pred_region
      %s153 = ssub.s32 2048, 2048
      %154 = vsyncadd [#allocation18], %s153
      %s155 = sshll.u32 [#allocation19], 4
      %s156 = int_to_ptr.vmem [resolvable:$true] %s155
      %161 = dma.hbm_to_vmem [thread:$0]  %s14, 2048, %s156, [#allocation18], 256, 256, 16
    $region61: #{cor_forward.1} parent=1 // pred_fallthru
      _
    // Predicated region
    $region62: #{cor_forward.1} parent=1 // pred_check
      _
    $region63: #{cor_forward.1} parent=1 // pred_check_branch
      %163 = sbr.rel (0) target = $region65
    $region64: #{cor_forward.1} parent=1 // pred_region
      %s165 = ssub.s32 2048, 2048
      %166 = vsyncadd [#allocation21], %s165
      %s167 = sshll.u32 [#allocation20], 4
      %s168 = int_to_ptr.vmem [resolvable:$true] %s167
      %173 = dma.hbm_to_vmem [thread:$0]  %s15, 2048, %s168, [#allocation21], 256, 256, 16
    $region65: #{cor_forward.1} parent=1 // pred_fallthru
      _
    // Predicated region
    $region66: #{cor_forward.1} parent=1 // pred_check
      _
    $region67: #{cor_forward.1} parent=1 // pred_check_branch
      %175 = sbr.rel (0) target = $region69
    $region68: #{cor_forward.1} parent=1 // pred_region
      _
    $region69: #{cor_forward.1} parent=1 // pred_fallthru
      _
    // Predicated region
    $region70: #{cor_forward.1} parent=1 // pred_check
      _
    $region71: #{cor_forward.1} parent=1 // pred_check_branch
      %177 = sbr.rel (0) target = $region73
    $region72: #{cor_forward.1} parent=1 // pred_region
      %178 = dma.done [#allocation3], 512
    $region73: #{cor_forward.1} parent=1 // pred_fallthru
      _
    // Predicated region
    $region74: #{cor_forward.1} parent=1 // pred_check
      _
    $region75: #{cor_forward.1} parent=1 // pred_check_branch
      %180 = sbr.rel (0) target = $region77
    $region76: #{cor_forward.1} parent=1 // pred_region
      %181 = dma.done [#allocation6], 256
    $region77: #{cor_forward.1} parent=1 // pred_fallthru
      _
    // Predicated region
    $region78: #{cor_forward.1} parent=1 // pred_check
      _
    $region79: #{cor_forward.1} parent=1 // pred_check_branch
      %183 = sbr.rel (0) target = $region81
    $region80: #{cor_forward.1} parent=1 // pred_region
      %184 = dma.done [#allocation6], 16
    $region81: #{cor_forward.1} parent=1 // pred_fallthru
      _
    // Predicated region
    $region82: #{cor_forward.1} parent=1 // pred_check
      _
    $region83: #{cor_forward.1} parent=1 // pred_check_branch
      %186 = sbr.rel (0) target = $region85
    $region84: #{cor_forward.1} parent=1 // pred_region
      %187 = dma.done [#allocation9], 2048
    $region85: #{cor_forward.1} parent=1 // pred_fallthru
      _
    // Predicated region
    $region86: #{cor_forward.1} parent=1 // pred_check
      _
    $region87: #{cor_forward.1} parent=1 // pred_check_branch
      %189 = sbr.rel (0) target = $region89
    $region88: #{cor_forward.1} parent=1 // pred_region
      %190 = dma.done [#allocation9], 16
    $region89: #{cor_forward.1} parent=1 // pred_fallthru
      _
    // Predicated region
    $region90: #{cor_forward.1} parent=1 // pred_check
      _
    $region91: #{cor_forward.1} parent=1 // pred_check_branch
      %192 = sbr.rel (0) target = $region93
    $region92: #{cor_forward.1} parent=1 // pred_region
      %193 = dma.done [#allocation12], 2048
    $region93: #{cor_forward.1} parent=1 // pred_fallthru
      _
    // Predicated region
    $region94: #{cor_forward.1} parent=1 // pred_check
      _
    $region95: #{cor_forward.1} parent=1 // pred_check_branch
      %195 = sbr.rel (0) target = $region97
    $region96: #{cor_forward.1} parent=1 // pred_region
      %196 = dma.done [#allocation12], 16
    $region97: #{cor_forward.1} parent=1 // pred_fallthru
      _
    // Predicated region
    $region98: #{cor_forward.1} parent=1 // pred_check
      _
    $region99: #{cor_forward.1} parent=1 // pred_check_branch
      %198 = sbr.rel (0) target = $region101
    $region100: #{cor_forward.1} parent=1 // pred_region
      %199 = dma.done [#allocation15], 2048
    $region101: #{cor_forward.1} parent=1 // pred_fallthru
      _
    // Predicated region
    $region102: #{cor_forward.1} parent=1 // pred_check
      _
    $region103: #{cor_forward.1} parent=1 // pred_check_branch
      %201 = sbr.rel (0) target = $region105
    $region104: #{cor_forward.1} parent=1 // pred_region
      %202 = dma.done [#allocation15], 16
    $region105: #{cor_forward.1} parent=1 // pred_fallthru
      _
    // Predicated region
    $region106: #{cor_forward.1} parent=1 // pred_check
      _
    $region107: #{cor_forward.1} parent=1 // pred_check_branch
      %204 = sbr.rel (0) target = $region109
    $region108: #{cor_forward.1} parent=1 // pred_region
      %205 = dma.done [#allocation18], 16
    $region109: #{cor_forward.1} parent=1 // pred_fallthru
      _
    // Predicated region
    $region110: #{cor_forward.1} parent=1 // pred_check
      _
    $region111: #{cor_forward.1} parent=1 // pred_check_branch
      %207 = sbr.rel (0) target = $region113
    $region112: #{cor_forward.1} parent=1 // pred_region
      %208 = dma.done [#allocation18], 2048
    $region113: #{cor_forward.1} parent=1 // pred_fallthru
      _
    // Predicated region
    $region114: #{cor_forward.1} parent=1 // pred_check
      _
    $region115: #{cor_forward.1} parent=1 // pred_check_branch
      %210 = sbr.rel (0) target = $region117
    $region116: #{cor_forward.1} parent=1 // pred_region
      %211 = dma.done [#allocation21], 2048
    $region117: #{cor_forward.1} parent=1 // pred_fallthru
      _
    %v212 = vld [vmem:[#allocation2] sm:$0xff]
    %v213 = vld [vmem:[#allocation2 + $0x8] sm:$0xff]
    %v214 = vld [vmem:[#allocation2 + $0x10] sm:$0xff]
    %v215 = vld [vmem:[#allocation2 + $0x18] sm:$0xff]
    %v216 = vmul.f32 %v212, %v212
    %v217 = vmul.f32 %v213, %v213
    %v218 = vmul.f32 %v214, %v214
    %v219 = vmul.f32 %v215, %v215
    %v220 = vadd.f32 %v216, %v217
    %221 = vadd.xlane.f32.xlu0 %v220
    %v222 = vpop.xlane.xlu0 %221
    %v223 = vadd.f32 %v218, %v219
    %224 = vadd.xlane.f32.xlu0 %v223
    %v225 = vpop.xlane.xlu0 %224
    %v226 = vmax.f32 %v222, 1e-24
    %v227 = vmax.f32 %v225, 1e-24
    %v228 = vrsqrt.pop %v226
    %v229 = vrsqrt.pop %v227
    %v230 = vmul.f32 %v212, %v228
    %v231 = vmul.f32 %v213, %v228
    %v232 = vmul.f32 %v214, %v229
    %v233 = vmul.f32 %v215, %v229
    %v234 = vld [vmem:[#allocation5] sm:$0xff]
    %v235 = vld [vmem:[#allocation5 + $0x8] sm:$0xff]
    %v236 = vld [vmem:[%s2] sm:$0xff]
    %v237 = vld [vmem:[%s2 + $0x8] sm:$0xff]
    %v238 = vld [vmem:[%s2 + $0x10] sm:$0xff]
    %v239 = vld [vmem:[%s2 + $0x18] sm:$0xff]
    %v240 = vld [vmem:[%s2 + $0x20] sm:$0xff]
    %v241 = vld [vmem:[%s2 + $0x28] sm:$0xff]
    %v242 = vld [vmem:[%s2 + $0x30] sm:$0xff]
    %v243 = vld [vmem:[%s2 + $0x38] sm:$0xff]
    %v244 = vld [vmem:[%s2 + $0x40] sm:$0xff]
    %v245 = vld [vmem:[%s2 + $0x48] sm:$0xff]
    %v246 = vld [vmem:[%s2 + $0x50] sm:$0xff]
    %v247 = vld [vmem:[%s2 + $0x58] sm:$0xff]
    %v248 = vld [vmem:[%s2 + $0x60] sm:$0xff]
    %v249 = vld [vmem:[%s2 + $0x68] sm:$0xff]
    %v250 = vld [vmem:[%s2 + $0x70] sm:$0xff]
    %v251 = vld [vmem:[%s2 + $0x78] sm:$0xff]
    %v252 = vld [vmem:[%s2 + $0x80] sm:$0xff]
    %v253 = vld [vmem:[%s2 + $0x88] sm:$0xff]
    %v254 = vld [vmem:[%s2 + $0x90] sm:$0xff]
    %v255 = vld [vmem:[%s2 + $0x98] sm:$0xff]
    %v256 = vld [vmem:[%s2 + $0xa0] sm:$0xff]
    %v257 = vld [vmem:[%s2 + $0xa8] sm:$0xff]
    %v258 = vld [vmem:[%s2 + $0xb0] sm:$0xff]
    %v259 = vld [vmem:[%s2 + $0xb8] sm:$0xff]
    %v260 = vld [vmem:[%s2 + $0xc0] sm:$0xff]
    %v261 = vld [vmem:[%s2 + $0xc8] sm:$0xff]
    %v262 = vld [vmem:[%s2 + $0xd0] sm:$0xff]
    %v263 = vld [vmem:[%s2 + $0xd8] sm:$0xff]
    %v264 = vld [vmem:[%s2 + $0xe0] sm:$0xff]
    %v265 = vld [vmem:[%s2 + $0xe8] sm:$0xff]
    %v266 = vld [vmem:[%s2 + $0xf0] sm:$0xff]
    %v267 = vld [vmem:[%s2 + $0xf8] sm:$0xff]
    %v268 = vld [vmem:[%s3] sm:$0xff]
    %v269 = vld [vmem:[%s3 + $0x8] sm:$0xff]
    %v270 = vld [vmem:[%s3 + $0x10] sm:$0xff]
    %v271 = vld [vmem:[%s3 + $0x18] sm:$0xff]
    %v272 = vld [vmem:[%s3 + $0x20] sm:$0xff]
    %v273 = vld [vmem:[%s3 + $0x28] sm:$0xff]
    %v274 = vld [vmem:[%s3 + $0x30] sm:$0xff]
    %v275 = vld [vmem:[%s3 + $0x38] sm:$0xff]
    %v276 = vld [vmem:[%s3 + $0x40] sm:$0xff]
    %v277 = vld [vmem:[%s3 + $0x48] sm:$0xff]
    %v278 = vld [vmem:[%s3 + $0x50] sm:$0xff]
    %v279 = vld [vmem:[%s3 + $0x58] sm:$0xff]
    %v280 = vld [vmem:[%s3 + $0x60] sm:$0xff]
    %v281 = vld [vmem:[%s3 + $0x68] sm:$0xff]
    %v282 = vld [vmem:[%s3 + $0x70] sm:$0xff]
    %v283 = vld [vmem:[%s3 + $0x78] sm:$0xff]
    %284 = vmatprep.subr.mxu0 0.0
    %285 = vmatpush1.msra.mxu0 %v268
    %286 = vmatprep.subr.mxu0 0.0
    %287 = vmatpush1.msra.mxu0 %v269
    %288 = vmatprep.subr.mxu0 0.0
    %289 = vmatpush1.msra.mxu0 %v270
    %290 = vmatprep.subr.mxu0 0.0
    %291 = vmatpush1.msra.mxu0 %v271
    %292 = vmatprep.subr.mxu0 0.0
    %293 = vmatpush1.msra.mxu0 %v272
    %294 = vmatprep.subr.mxu0 0.0
    %295 = vmatpush1.msra.mxu0 %v273
    %296 = vmatprep.subr.mxu0 0.0
    %297 = vmatpush1.msra.mxu0 %v274
    %298 = vmatprep.subr.mxu0 0.0
    %299 = vmatpush1.msra.mxu0 %v275
    %300 = vmatprep.subr.mxu0 0.0
    %301 = vmatpush1.msra.mxu0 %v276
    %302 = vmatprep.subr.mxu0 0.0
    %303 = vmatpush1.msra.mxu0 %v277
    %304 = vmatprep.subr.mxu0 0.0
    %305 = vmatpush1.msra.mxu0 %v278
    %306 = vmatprep.subr.mxu0 0.0
    %307 = vmatpush1.msra.mxu0 %v279
    %308 = vmatprep.subr.mxu0 0.0
    %309 = vmatpush1.msra.mxu0 %v280
    %310 = vmatprep.subr.mxu0 0.0
    %311 = vmatpush1.msra.mxu0 %v281
    %312 = vmatprep.subr.mxu0 0.0
    %313 = vmatpush1.msra.mxu0 %v282
    %314 = vmatprep.subr.mxu0 0.0
    %315 = vmatpush1.msra.mxu0 %v283
    %316 = vmatprep.subr.mxu0 0.0
    %317 = vmatpush1.msra.mxu0 0.0
    %318 = vmatprep.subr.mxu0 0.0
    %319 = vmatpush1.msra.mxu0 0.0
    %320 = vmatprep.subr.mxu0 0.0
    %321 = vmatpush1.msra.mxu0 0.0
    %322 = vmatprep.subr.mxu0 0.0
    %323 = vmatpush1.msra.mxu0 0.0
    %324 = vmatprep.subr.mxu0 0.0
    %325 = vmatpush1.msra.mxu0 0.0
    %326 = vmatprep.subr.mxu0 0.0
    %327 = vmatpush1.msra.mxu0 0.0
    %328 = vmatprep.subr.mxu0 0.0
    %329 = vmatpush1.msra.mxu0 0.0
    %330 = vmatprep.subr.mxu0 0.0
    %331 = vmatpush1.msra.mxu0 0.0
    %332 = vmatprep.subr.mxu0 0.0
    %333 = vmatpush1.msra.mxu0 0.0
    %334 = vmatprep.subr.mxu0 0.0
    %335 = vmatpush1.msra.mxu0 0.0
    %336 = vmatprep.subr.mxu0 0.0
    %337 = vmatpush1.msra.mxu0 0.0
    %338 = vmatprep.subr.mxu0 0.0
    %339 = vmatpush1.msra.mxu0 0.0
    %340 = vmatprep.subr.mxu0 0.0
    %341 = vmatpush1.msra.mxu0 0.0
    %342 = vmatprep.subr.mxu0 0.0
    %343 = vmatpush1.msra.mxu0 0.0
    %344 = vmatprep.subr.mxu0 0.0
    %345 = vmatpush1.msra.mxu0 0.0
    %346 = vmatprep.subr.mxu0 0.0
    %347 = vmatpush1.msra.mxu0 0.0
    %348 = vmatprep.mubr.f32.mxu0 0.0
    %349 = vmatmul.mubr.f32.gmra.mrb[0].mxu0 %v234
    %v350 = vpop.f32.mrb[0].mxu0
    %v351 = vadd.f32 0.0, %v350
    %v352 = vpop.f32.mrb[0].mxu0
    %353 = vmatprep.mubr.f32.mxu0 0.0
    %354 = vmatmul.mubr.f32.gmra.mrb[0].mxu0 %v235
    %v355 = vpop.f32.mrb[0].mxu0
    %v356 = vadd.f32 0.0, %v355
    %v357 = vpop.f32.mrb[0].mxu0
    %358 = vdwg.mxu0
    %359 = vmatprep.subr.mxu0 0.0
    %360 = vmatpush1.msra.mxu0 %v236
    %361 = vmatprep.subr.mxu0 0.0
    %362 = vmatpush1.msra.mxu0 %v237
    %363 = vmatprep.subr.mxu0 0.0
    %364 = vmatpush1.msra.mxu0 %v238
    %365 = vmatprep.subr.mxu0 0.0
    %366 = vmatpush1.msra.mxu0 %v239
    %367 = vmatprep.subr.mxu0 0.0
    %368 = vmatpush1.msra.mxu0 %v240
    %369 = vmatprep.subr.mxu0 0.0
    %370 = vmatpush1.msra.mxu0 %v241
    %371 = vmatprep.subr.mxu0 0.0
    %372 = vmatpush1.msra.mxu0 %v242
    %373 = vmatprep.subr.mxu0 0.0
    %374 = vmatpush1.msra.mxu0 %v243
    %375 = vmatprep.subr.mxu0 0.0
    %376 = vmatpush1.msra.mxu0 %v244
    %377 = vmatprep.subr.mxu0 0.0
    %378 = vmatpush1.msra.mxu0 %v245
    %379 = vmatprep.subr.mxu0 0.0
    %380 = vmatpush1.msra.mxu0 %v246
    %381 = vmatprep.subr.mxu0 0.0
    %382 = vmatpush1.msra.mxu0 %v247
    %383 = vmatprep.subr.mxu0 0.0
    %384 = vmatpush1.msra.mxu0 %v248
    %385 = vmatprep.subr.mxu0 0.0
    %386 = vmatpush1.msra.mxu0 %v249
    %387 = vmatprep.subr.mxu0 0.0
    %388 = vmatpush1.msra.mxu0 %v250
    %389 = vmatprep.subr.mxu0 0.0
    %390 = vmatpush1.msra.mxu0 %v251
    %391 = vmatprep.subr.mxu0 0.0
    %392 = vmatpush1.msra.mxu0 %v252
    %393 = vmatprep.subr.mxu0 0.0
    %394 = vmatpush1.msra.mxu0 %v253
    %395 = vmatprep.subr.mxu0 0.0
    %396 = vmatpush1.msra.mxu0 %v254
    %397 = vmatprep.subr.mxu0 0.0
    %398 = vmatpush1.msra.mxu0 %v255
    %399 = vmatprep.subr.mxu0 0.0
    %400 = vmatpush1.msra.mxu0 %v256
    %401 = vmatprep.subr.mxu0 0.0
    %402 = vmatpush1.msra.mxu0 %v257
    %403 = vmatprep.subr.mxu0 0.0
    %404 = vmatpush1.msra.mxu0 %v258
    %405 = vmatprep.subr.mxu0 0.0
    %406 = vmatpush1.msra.mxu0 %v259
    %407 = vmatprep.subr.mxu0 0.0
    %408 = vmatpush1.msra.mxu0 %v260
    %409 = vmatprep.subr.mxu0 0.0
    %410 = vmatpush1.msra.mxu0 %v261
    %411 = vmatprep.subr.mxu0 0.0
    %412 = vmatpush1.msra.mxu0 %v262
    %413 = vmatprep.subr.mxu0 0.0
    %414 = vmatpush1.msra.mxu0 %v263
    %415 = vmatprep.subr.mxu0 0.0
    %416 = vmatpush1.msra.mxu0 %v264
    %417 = vmatprep.subr.mxu0 0.0
    %418 = vmatpush1.msra.mxu0 %v265
    %419 = vmatprep.subr.mxu0 0.0
    %420 = vmatpush1.msra.mxu0 %v266
    %421 = vmatprep.subr.mxu0 0.0
    %422 = vmatpush1.msra.mxu0 %v267
    %423 = vmatprep.mubr.f32.mxu0 %v231
    %424 = vmatmul.mubr.f32.gmra.mrb[0].mxu0 %v230
    %v425 = vpop.f32.mrb[0].mxu0
    %v426 = vadd.f32 %v351, %v425
    %v427 = vpop.f32.mrb[0].mxu0
    %428 = vmatprep.mubr.f32.mxu0 %v233
    %429 = vmatmul.mubr.f32.gmra.mrb[0].mxu0 %v232
    %v430 = vpop.f32.mrb[0].mxu0
    %v431 = vadd.f32 %v356, %v430
    %v432 = vpop.f32.mrb[0].mxu0
    %433 = vdwg.mxu0
    %v434 = vld [vmem:[#allocation7] sm:$0x1]
    %v436 = vlaneseq
    %v437 = vshrl.u32 %v436, 7
    %v438 = vsub.s32 0, %v437
    %v439 = vrot.slane %v434, %v438
    %v441 = vadd.f32 %v426, %v439
    %v442 = vadd.f32 %v431, %v439
    %v443 = vtanh.pop %v441
    %v444 = vtanh.pop %v442
    %v445 = vld [vmem:[#allocation8] sm:$0xff]
    %v446 = vld [vmem:[#allocation8 + $0x8] sm:$0xff]
    %v447 = vld [vmem:[#allocation8 + $0x10] sm:$0xff]
    %v448 = vld [vmem:[#allocation8 + $0x18] sm:$0xff]
    %v449 = vld [vmem:[#allocation8 + $0x20] sm:$0xff]
    %v450 = vld [vmem:[#allocation8 + $0x28] sm:$0xff]
    %v451 = vld [vmem:[#allocation8 + $0x30] sm:$0xff]
    %v452 = vld [vmem:[#allocation8 + $0x38] sm:$0xff]
    %v453 = vld [vmem:[#allocation8 + $0x40] sm:$0xff]
    %v454 = vld [vmem:[#allocation8 + $0x48] sm:$0xff]
    %v455 = vld [vmem:[#allocation8 + $0x50] sm:$0xff]
    %v456 = vld [vmem:[#allocation8 + $0x58] sm:$0xff]
    %v457 = vld [vmem:[#allocation8 + $0x60] sm:$0xff]
    %v458 = vld [vmem:[#allocation8 + $0x68] sm:$0xff]
    %v459 = vld [vmem:[#allocation8 + $0x70] sm:$0xff]
    %v460 = vld [vmem:[#allocation8 + $0x78] sm:$0xff]
    %v461 = vld [vmem:[#allocation10] sm:$0x1]
    %v463 = vlaneseq
    %v464 = vshrl.u32 %v463, 7
    %v465 = vsub.s32 0, %v464
    %v466 = vrot.slane %v461, %v465
    %468 = vmatprep.subr.mxu0 0.0
    %469 = vmatpush1.msra.mxu0 %v445
    %470 = vmatprep.subr.mxu0 0.0
    %471 = vmatpush1.msra.mxu0 %v446
    %472 = vmatprep.subr.mxu0 0.0
    %473 = vmatpush1.msra.mxu0 %v447
    %474 = vmatprep.subr.mxu0 0.0
    %475 = vmatpush1.msra.mxu0 %v448
    %476 = vmatprep.subr.mxu0 0.0
    %477 = vmatpush1.msra.mxu0 %v449
    %478 = vmatprep.subr.mxu0 0.0
    %479 = vmatpush1.msra.mxu0 %v450
    %480 = vmatprep.subr.mxu0 0.0
    %481 = vmatpush1.msra.mxu0 %v451
    %482 = vmatprep.subr.mxu0 0.0
    %483 = vmatpush1.msra.mxu0 %v452
    %484 = vmatprep.subr.mxu0 0.0
    %485 = vmatpush1.msra.mxu0 %v453
    %486 = vmatprep.subr.mxu0 0.0
    %487 = vmatpush1.msra.mxu0 %v454
    %488 = vmatprep.subr.mxu0 0.0
    %489 = vmatpush1.msra.mxu0 %v455
    %490 = vmatprep.subr.mxu0 0.0
    %491 = vmatpush1.msra.mxu0 %v456
    %492 = vmatprep.subr.mxu0 0.0
    %493 = vmatpush1.msra.mxu0 %v457
    %494 = vmatprep.subr.mxu0 0.0
    %495 = vmatpush1.msra.mxu0 %v458
    %496 = vmatprep.subr.mxu0 0.0
    %497 = vmatpush1.msra.mxu0 %v459
    %498 = vmatprep.subr.mxu0 0.0
    %499 = vmatpush1.msra.mxu0 %v460
    %500 = vmatprep.subr.mxu0 0.0
    %501 = vmatpush1.msra.mxu0 0.0
    %502 = vmatprep.subr.mxu0 0.0
    %503 = vmatpush1.msra.mxu0 0.0
    %504 = vmatprep.subr.mxu0 0.0
    %505 = vmatpush1.msra.mxu0 0.0
    %506 = vmatprep.subr.mxu0 0.0
    %507 = vmatpush1.msra.mxu0 0.0
    %508 = vmatprep.subr.mxu0 0.0
    %509 = vmatpush1.msra.mxu0 0.0
    %510 = vmatprep.subr.mxu0 0.0
    %511 = vmatpush1.msra.mxu0 0.0
    %512 = vmatprep.subr.mxu0 0.0
    %513 = vmatpush1.msra.mxu0 0.0
    %514 = vmatprep.subr.mxu0 0.0
    %515 = vmatpush1.msra.mxu0 0.0
    %516 = vmatprep.subr.mxu0 0.0
    %517 = vmatpush1.msra.mxu0 0.0
    %518 = vmatprep.subr.mxu0 0.0
    %519 = vmatpush1.msra.mxu0 0.0
    %520 = vmatprep.subr.mxu0 0.0
    %521 = vmatpush1.msra.mxu0 0.0
    %522 = vmatprep.subr.mxu0 0.0
    %523 = vmatpush1.msra.mxu0 0.0
    %524 = vmatprep.subr.mxu0 0.0
    %525 = vmatpush1.msra.mxu0 0.0
    %526 = vmatprep.subr.mxu0 0.0
    %527 = vmatpush1.msra.mxu0 0.0
    %528 = vmatprep.subr.mxu0 0.0
    %529 = vmatpush1.msra.mxu0 0.0
    %530 = vmatprep.subr.mxu0 0.0
    %531 = vmatpush1.msra.mxu0 0.0
    %532 = vmatprep.mubr.f32.mxu0 0.0
    %533 = vmatmul.mubr.f32.gmra.mrb[0].mxu0 %v443
    %v534 = vpop.f32.mrb[0].mxu0
    %v535 = vadd.f32 %v466, %v534
    %v536 = vpop.f32.mrb[0].mxu0
    %537 = vmatprep.mubr.f32.mxu0 0.0
    %538 = vmatmul.mubr.f32.gmra.mrb[0].mxu0 %v444
    %v539 = vpop.f32.mrb[0].mxu0
    %v540 = vadd.f32 %v466, %v539
    %v541 = vpop.f32.mrb[0].mxu0
    %542 = vdwg.mxu0
    %543 = vst [vmem:[%s18] sm:$0xff] %v535
    %544 = vst [vmem:[%s18 + $0x8] sm:$0xff] %v540
    %v545 = vld [vmem:[#allocation11] sm:$0xff]
    %v546 = vld [vmem:[#allocation11 + $0x8] sm:$0xff]
    %v547 = vld [vmem:[#allocation11 + $0x10] sm:$0xff]
    %v548 = vld [vmem:[#allocation11 + $0x18] sm:$0xff]
    %v549 = vld [vmem:[#allocation11 + $0x20] sm:$0xff]
    %v550 = vld [vmem:[#allocation11 + $0x28] sm:$0xff]
    %v551 = vld [vmem:[#allocation11 + $0x30] sm:$0xff]
    %v552 = vld [vmem:[#allocation11 + $0x38] sm:$0xff]
    %v553 = vld [vmem:[#allocation11 + $0x40] sm:$0xff]
    %v554 = vld [vmem:[#allocation11 + $0x48] sm:$0xff]
    %v555 = vld [vmem:[#allocation11 + $0x50] sm:$0xff]
    %v556 = vld [vmem:[#allocation11 + $0x58] sm:$0xff]
    %v557 = vld [vmem:[#allocation11 + $0x60] sm:$0xff]
    %v558 = vld [vmem:[#allocation11 + $0x68] sm:$0xff]
    %v559 = vld [vmem:[#allocation11 + $0x70] sm:$0xff]
    %v560 = vld [vmem:[#allocation11 + $0x78] sm:$0xff]
    %v561 = vld [vmem:[%s8] sm:$0xff]
    %v562 = vld [vmem:[%s8 + $0x8] sm:$0xff]
    %v563 = vld [vmem:[%s8 + $0x10] sm:$0xff]
    %v564 = vld [vmem:[%s8 + $0x18] sm:$0xff]
    %v565 = vld [vmem:[%s8 + $0x20] sm:$0xff]
    %v566 = vld [vmem:[%s8 + $0x28] sm:$0xff]
    %v567 = vld [vmem:[%s8 + $0x30] sm:$0xff]
    %v568 = vld [vmem:[%s8 + $0x38] sm:$0xff]
    %v569 = vld [vmem:[%s8 + $0x40] sm:$0xff]
    %v570 = vld [vmem:[%s8 + $0x48] sm:$0xff]
    %v571 = vld [vmem:[%s8 + $0x50] sm:$0xff]
    %v572 = vld [vmem:[%s8 + $0x58] sm:$0xff]
    %v573 = vld [vmem:[%s8 + $0x60] sm:$0xff]
    %v574 = vld [vmem:[%s8 + $0x68] sm:$0xff]
    %v575 = vld [vmem:[%s8 + $0x70] sm:$0xff]
    %v576 = vld [vmem:[%s8 + $0x78] sm:$0xff]
    %577 = vmatprep.subr.mxu0 0.0
    %578 = vmatpush1.msra.mxu0 %v561
    %579 = vmatprep.subr.mxu0 0.0
    %580 = vmatpush1.msra.mxu0 %v562
    %581 = vmatprep.subr.mxu0 0.0
    %582 = vmatpush1.msra.mxu0 %v563
    %583 = vmatprep.subr.mxu0 0.0
    %584 = vmatpush1.msra.mxu0 %v564
    %585 = vmatprep.subr.mxu0 0.0
    %586 = vmatpush1.msra.mxu0 %v565
    %587 = vmatprep.subr.mxu0 0.0
    %588 = vmatpush1.msra.mxu0 %v566
    %589 = vmatprep.subr.mxu0 0.0
    %590 = vmatpush1.msra.mxu0 %v567
    %591 = vmatprep.subr.mxu0 0.0
    %592 = vmatpush1.msra.mxu0 %v568
    %593 = vmatprep.subr.mxu0 0.0
    %594 = vmatpush1.msra.mxu0 %v569
    %595 = vmatprep.subr.mxu0 0.0
    %596 = vmatpush1.msra.mxu0 %v570
    %597 = vmatprep.subr.mxu0 0.0
    %598 = vmatpush1.msra.mxu0 %v571
    %599 = vmatprep.subr.mxu0 0.0
    %600 = vmatpush1.msra.mxu0 %v572
    %601 = vmatprep.subr.mxu0 0.0
    %602 = vmatpush1.msra.mxu0 %v573
    %603 = vmatprep.subr.mxu0 0.0
    %604 = vmatpush1.msra.mxu0 %v574
    %605 = vmatprep.subr.mxu0 0.0
    %606 = vmatpush1.msra.mxu0 %v575
    %607 = vmatprep.subr.mxu0 0.0
    %608 = vmatpush1.msra.mxu0 %v576
    %609 = vmatprep.subr.mxu0 0.0
    %610 = vmatpush1.msra.mxu0 0.0
    %611 = vmatprep.subr.mxu0 0.0
    %612 = vmatpush1.msra.mxu0 0.0
    %613 = vmatprep.subr.mxu0 0.0
    %614 = vmatpush1.msra.mxu0 0.0
    %615 = vmatprep.subr.mxu0 0.0
    %616 = vmatpush1.msra.mxu0 0.0
    %617 = vmatprep.subr.mxu0 0.0
    %618 = vmatpush1.msra.mxu0 0.0
    %619 = vmatprep.subr.mxu0 0.0
    %620 = vmatpush1.msra.mxu0 0.0
    %621 = vmatprep.subr.mxu0 0.0
    %622 = vmatpush1.msra.mxu0 0.0
    %623 = vmatprep.subr.mxu0 0.0
    %624 = vmatpush1.msra.mxu0 0.0
    %625 = vmatprep.subr.mxu0 0.0
    %626 = vmatpush1.msra.mxu0 0.0
    %627 = vmatprep.subr.mxu0 0.0
    %628 = vmatpush1.msra.mxu0 0.0
    %629 = vmatprep.subr.mxu0 0.0
    %630 = vmatpush1.msra.mxu0 0.0
    %631 = vmatprep.subr.mxu0 0.0
    %632 = vmatpush1.msra.mxu0 0.0
    %633 = vmatprep.subr.mxu0 0.0
    %634 = vmatpush1.msra.mxu0 0.0
    %635 = vmatprep.subr.mxu0 0.0
    %636 = vmatpush1.msra.mxu0 0.0
    %637 = vmatprep.subr.mxu0 0.0
    %638 = vmatpush1.msra.mxu0 0.0
    %639 = vmatprep.subr.mxu0 0.0
    %640 = vmatpush1.msra.mxu0 0.0
    %641 = vmatprep.mubr.f32.mxu0 0.0
    %642 = vmatmul.mubr.f32.gmra.mrb[0].mxu0 %v535
    %v643 = vpop.f32.mrb[0].mxu0
    %v644 = vadd.f32 0.0, %v643
    %v645 = vpop.f32.mrb[0].mxu0
    %646 = vmatprep.mubr.f32.mxu0 0.0
    %647 = vmatmul.mubr.f32.gmra.mrb[0].mxu0 %v540
    %v648 = vpop.f32.mrb[0].mxu0
    %v649 = vadd.f32 0.0, %v648
    %v650 = vpop.f32.mrb[0].mxu0
    %651 = vdwg.mxu0
    %652 = vmatprep.subr.mxu0 0.0
    %653 = vmatpush1.msra.mxu0 %v545
    %654 = vmatprep.subr.mxu0 0.0
    %655 = vmatpush1.msra.mxu0 %v546
    %656 = vmatprep.subr.mxu0 0.0
    %657 = vmatpush1.msra.mxu0 %v547
    %658 = vmatprep.subr.mxu0 0.0
    %659 = vmatpush1.msra.mxu0 %v548
    %660 = vmatprep.subr.mxu0 0.0
    %661 = vmatpush1.msra.mxu0 %v549
    %662 = vmatprep.subr.mxu0 0.0
    %663 = vmatpush1.msra.mxu0 %v550
    %664 = vmatprep.subr.mxu0 0.0
    %665 = vmatpush1.msra.mxu0 %v551
    %666 = vmatprep.subr.mxu0 0.0
    %667 = vmatpush1.msra.mxu0 %v552
    %668 = vmatprep.subr.mxu0 0.0
    %669 = vmatpush1.msra.mxu0 %v553
    %670 = vmatprep.subr.mxu0 0.0
    %671 = vmatpush1.msra.mxu0 %v554
    %672 = vmatprep.subr.mxu0 0.0
    %673 = vmatpush1.msra.mxu0 %v555
    %674 = vmatprep.subr.mxu0 0.0
    %675 = vmatpush1.msra.mxu0 %v556
    %676 = vmatprep.subr.mxu0 0.0
    %677 = vmatpush1.msra.mxu0 %v557
    %678 = vmatprep.subr.mxu0 0.0
    %679 = vmatpush1.msra.mxu0 %v558
    %680 = vmatprep.subr.mxu0 0.0
    %681 = vmatpush1.msra.mxu0 %v559
    %682 = vmatprep.subr.mxu0 0.0
    %683 = vmatpush1.msra.mxu0 %v560
    %684 = vmatprep.subr.mxu0 0.0
    %685 = vmatpush1.msra.mxu0 0.0
    %686 = vmatprep.subr.mxu0 0.0
    %687 = vmatpush1.msra.mxu0 0.0
    %688 = vmatprep.subr.mxu0 0.0
    %689 = vmatpush1.msra.mxu0 0.0
    %690 = vmatprep.subr.mxu0 0.0
    %691 = vmatpush1.msra.mxu0 0.0
    %692 = vmatprep.subr.mxu0 0.0
    %693 = vmatpush1.msra.mxu0 0.0
    %694 = vmatprep.subr.mxu0 0.0
    %695 = vmatpush1.msra.mxu0 0.0
    %696 = vmatprep.subr.mxu0 0.0
    %697 = vmatpush1.msra.mxu0 0.0
    %698 = vmatprep.subr.mxu0 0.0
    %699 = vmatpush1.msra.mxu0 0.0
    %700 = vmatprep.subr.mxu0 0.0
    %701 = vmatpush1.msra.mxu0 0.0
    %702 = vmatprep.subr.mxu0 0.0
    %703 = vmatpush1.msra.mxu0 0.0
    %704 = vmatprep.subr.mxu0 0.0
    %705 = vmatpush1.msra.mxu0 0.0
    %706 = vmatprep.subr.mxu0 0.0
    %707 = vmatpush1.msra.mxu0 0.0
    %708 = vmatprep.subr.mxu0 0.0
    %709 = vmatpush1.msra.mxu0 0.0
    %710 = vmatprep.subr.mxu0 0.0
    %711 = vmatpush1.msra.mxu0 0.0
    %712 = vmatprep.subr.mxu0 0.0
    %713 = vmatpush1.msra.mxu0 0.0
    %714 = vmatprep.subr.mxu0 0.0
    %715 = vmatpush1.msra.mxu0 0.0
    %716 = vmatprep.mubr.f32.mxu0 0.0
    %717 = vmatmul.mubr.f32.gmra.mrb[0].mxu0 %v234
    %v718 = vpop.f32.mrb[0].mxu0
    %v719 = vadd.f32 %v644, %v718
    %v720 = vpop.f32.mrb[0].mxu0
    %721 = vmatprep.mubr.f32.mxu0 0.0
    %722 = vmatmul.mubr.f32.gmra.mrb[0].mxu0 %v235
    %v723 = vpop.f32.mrb[0].mxu0
    %v724 = vadd.f32 %v649, %v723
    %v725 = vpop.f32.mrb[0].mxu0
    %726 = vdwg.mxu0
    %v727 = vld [vmem:[#allocation13] sm:$0x1]
    %v729 = vlaneseq
    %v730 = vshrl.u32 %v729, 7
    %v731 = vsub.s32 0, %v730
    %v732 = vrot.slane %v727, %v731
    %v734 = vadd.f32 %v719, %v732
    %v735 = vadd.f32 %v724, %v732
    %v736 = vtanh.pop %v734
    %v737 = vtanh.pop %v735
    %v738 = vld [vmem:[#allocation14] sm:$0xff]
    %v739 = vld [vmem:[#allocation14 + $0x8] sm:$0xff]
    %v740 = vld [vmem:[#allocation14 + $0x10] sm:$0xff]
    %v741 = vld [vmem:[#allocation14 + $0x18] sm:$0xff]
    %v742 = vld [vmem:[#allocation14 + $0x20] sm:$0xff]
    %v743 = vld [vmem:[#allocation14 + $0x28] sm:$0xff]
    %v744 = vld [vmem:[#allocation14 + $0x30] sm:$0xff]
    %v745 = vld [vmem:[#allocation14 + $0x38] sm:$0xff]
    %v746 = vld [vmem:[#allocation14 + $0x40] sm:$0xff]
    %v747 = vld [vmem:[#allocation14 + $0x48] sm:$0xff]
    %v748 = vld [vmem:[#allocation14 + $0x50] sm:$0xff]
    %v749 = vld [vmem:[#allocation14 + $0x58] sm:$0xff]
    %v750 = vld [vmem:[#allocation14 + $0x60] sm:$0xff]
    %v751 = vld [vmem:[#allocation14 + $0x68] sm:$0xff]
    %v752 = vld [vmem:[#allocation14 + $0x70] sm:$0xff]
    %v753 = vld [vmem:[#allocation14 + $0x78] sm:$0xff]
    %v754 = vld [vmem:[#allocation16] sm:$0x1]
    %v756 = vlaneseq
    %v757 = vshrl.u32 %v756, 7
    %v758 = vsub.s32 0, %v757
    %v759 = vrot.slane %v754, %v758
    %761 = vmatprep.subr.mxu0 0.0
    %762 = vmatpush1.msra.mxu0 %v738
    %763 = vmatprep.subr.mxu0 0.0
    %764 = vmatpush1.msra.mxu0 %v739
    %765 = vmatprep.subr.mxu0 0.0
    %766 = vmatpush1.msra.mxu0 %v740
    %767 = vmatprep.subr.mxu0 0.0
    %768 = vmatpush1.msra.mxu0 %v741
    %769 = vmatprep.subr.mxu0 0.0
    %770 = vmatpush1.msra.mxu0 %v742
    %771 = vmatprep.subr.mxu0 0.0
    %772 = vmatpush1.msra.mxu0 %v743
    %773 = vmatprep.subr.mxu0 0.0
    %774 = vmatpush1.msra.mxu0 %v744
    %775 = vmatprep.subr.mxu0 0.0
    %776 = vmatpush1.msra.mxu0 %v745
    %777 = vmatprep.subr.mxu0 0.0
    %778 = vmatpush1.msra.mxu0 %v746
    %779 = vmatprep.subr.mxu0 0.0
    %780 = vmatpush1.msra.mxu0 %v747
    %781 = vmatprep.subr.mxu0 0.0
    %782 = vmatpush1.msra.mxu0 %v748
    %783 = vmatprep.subr.mxu0 0.0
    %784 = vmatpush1.msra.mxu0 %v749
    %785 = vmatprep.subr.mxu0 0.0
    %786 = vmatpush1.msra.mxu0 %v750
    %787 = vmatprep.subr.mxu0 0.0
    %788 = vmatpush1.msra.mxu0 %v751
    %789 = vmatprep.subr.mxu0 0.0
    %790 = vmatpush1.msra.mxu0 %v752
    %791 = vmatprep.subr.mxu0 0.0
    %792 = vmatpush1.msra.mxu0 %v753
    %793 = vmatprep.subr.mxu0 0.0
    %794 = vmatpush1.msra.mxu0 0.0
    %795 = vmatprep.subr.mxu0 0.0
    %796 = vmatpush1.msra.mxu0 0.0
    %797 = vmatprep.subr.mxu0 0.0
    %798 = vmatpush1.msra.mxu0 0.0
    %799 = vmatprep.subr.mxu0 0.0
    %800 = vmatpush1.msra.mxu0 0.0
    %801 = vmatprep.subr.mxu0 0.0
    %802 = vmatpush1.msra.mxu0 0.0
    %803 = vmatprep.subr.mxu0 0.0
    %804 = vmatpush1.msra.mxu0 0.0
    %805 = vmatprep.subr.mxu0 0.0
    %806 = vmatpush1.msra.mxu0 0.0
    %807 = vmatprep.subr.mxu0 0.0
    %808 = vmatpush1.msra.mxu0 0.0
    %809 = vmatprep.subr.mxu0 0.0
    %810 = vmatpush1.msra.mxu0 0.0
    %811 = vmatprep.subr.mxu0 0.0
    %812 = vmatpush1.msra.mxu0 0.0
    %813 = vmatprep.subr.mxu0 0.0
    %814 = vmatpush1.msra.mxu0 0.0
    %815 = vmatprep.subr.mxu0 0.0
    %816 = vmatpush1.msra.mxu0 0.0
    %817 = vmatprep.subr.mxu0 0.0
    %818 = vmatpush1.msra.mxu0 0.0
    %819 = vmatprep.subr.mxu0 0.0
    %820 = vmatpush1.msra.mxu0 0.0
    %821 = vmatprep.subr.mxu0 0.0
    %822 = vmatpush1.msra.mxu0 0.0
    %823 = vmatprep.subr.mxu0 0.0
    %824 = vmatpush1.msra.mxu0 0.0
    %825 = vmatprep.mubr.f32.mxu0 0.0
    %826 = vmatmul.mubr.f32.gmra.mrb[0].mxu0 %v736
    %v827 = vpop.f32.mrb[0].mxu0
    %v828 = vadd.f32 %v759, %v827
    %v829 = vpop.f32.mrb[0].mxu0
    %830 = vmatprep.mubr.f32.mxu0 0.0
    %831 = vmatmul.mubr.f32.gmra.mrb[0].mxu0 %v737
    %v832 = vpop.f32.mrb[0].mxu0
    %v833 = vadd.f32 %v759, %v832
    %v834 = vpop.f32.mrb[0].mxu0
    %835 = vdwg.mxu0
    %v836 = vld [vmem:[%s12] sm:$0xff]
    %v837 = vld [vmem:[%s12 + $0x8] sm:$0xff]
    %v838 = vld [vmem:[%s12 + $0x10] sm:$0xff]
    %v839 = vld [vmem:[%s12 + $0x18] sm:$0xff]
    %v840 = vld [vmem:[%s12 + $0x20] sm:$0xff]
    %v841 = vld [vmem:[%s12 + $0x28] sm:$0xff]
    %v842 = vld [vmem:[%s12 + $0x30] sm:$0xff]
    %v843 = vld [vmem:[%s12 + $0x38] sm:$0xff]
    %v844 = vld [vmem:[%s12 + $0x40] sm:$0xff]
    %v845 = vld [vmem:[%s12 + $0x48] sm:$0xff]
    %v846 = vld [vmem:[%s12 + $0x50] sm:$0xff]
    %v847 = vld [vmem:[%s12 + $0x58] sm:$0xff]
    %v848 = vld [vmem:[%s12 + $0x60] sm:$0xff]
    %v849 = vld [vmem:[%s12 + $0x68] sm:$0xff]
    %v850 = vld [vmem:[%s12 + $0x70] sm:$0xff]
    %v851 = vld [vmem:[%s12 + $0x78] sm:$0xff]
    %v852 = vld [vmem:[#allocation17] sm:$0x1]
    %v854 = vlaneseq
    %v855 = vshrl.u32 %v854, 7
    %v856 = vsub.s32 0, %v855
    %v857 = vrot.slane %v852, %v856
    %859 = vmatprep.subr.mxu0 0.0
    %860 = vmatpush1.msra.mxu0 %v836
    %861 = vmatprep.subr.mxu0 0.0
    %862 = vmatpush1.msra.mxu0 %v837
    %863 = vmatprep.subr.mxu0 0.0
    %864 = vmatpush1.msra.mxu0 %v838
    %865 = vmatprep.subr.mxu0 0.0
    %866 = vmatpush1.msra.mxu0 %v839
    %867 = vmatprep.subr.mxu0 0.0
    %868 = vmatpush1.msra.mxu0 %v840
    %869 = vmatprep.subr.mxu0 0.0
    %870 = vmatpush1.msra.mxu0 %v841
    %871 = vmatprep.subr.mxu0 0.0
    %872 = vmatpush1.msra.mxu0 %v842
    %873 = vmatprep.subr.mxu0 0.0
    %874 = vmatpush1.msra.mxu0 %v843
    %875 = vmatprep.subr.mxu0 0.0
    %876 = vmatpush1.msra.mxu0 %v844
    %877 = vmatprep.subr.mxu0 0.0
    %878 = vmatpush1.msra.mxu0 %v845
    %879 = vmatprep.subr.mxu0 0.0
    %880 = vmatpush1.msra.mxu0 %v846
    %881 = vmatprep.subr.mxu0 0.0
    %882 = vmatpush1.msra.mxu0 %v847
    %883 = vmatprep.subr.mxu0 0.0
    %884 = vmatpush1.msra.mxu0 %v848
    %885 = vmatprep.subr.mxu0 0.0
    %886 = vmatpush1.msra.mxu0 %v849
    %887 = vmatprep.subr.mxu0 0.0
    %888 = vmatpush1.msra.mxu0 %v850
    %889 = vmatprep.subr.mxu0 0.0
    %890 = vmatpush1.msra.mxu0 %v851
    %891 = vmatprep.subr.mxu0 0.0
    %892 = vmatpush1.msra.mxu0 0.0
    %893 = vmatprep.subr.mxu0 0.0
    %894 = vmatpush1.msra.mxu0 0.0
    %895 = vmatprep.subr.mxu0 0.0
    %896 = vmatpush1.msra.mxu0 0.0
    %897 = vmatprep.subr.mxu0 0.0
    %898 = vmatpush1.msra.mxu0 0.0
    %899 = vmatprep.subr.mxu0 0.0
    %900 = vmatpush1.msra.mxu0 0.0
    %901 = vmatprep.subr.mxu0 0.0
    %902 = vmatpush1.msra.mxu0 0.0
    %903 = vmatprep.subr.mxu0 0.0
    %904 = vmatpush1.msra.mxu0 0.0
    %905 = vmatprep.subr.mxu0 0.0
    %906 = vmatpush1.msra.mxu0 0.0
    %907 = vmatprep.subr.mxu0 0.0
    %908 = vmatpush1.msra.mxu0 0.0
    %909 = vmatprep.subr.mxu0 0.0
    %910 = vmatpush1.msra.mxu0 0.0
    %911 = vmatprep.subr.mxu0 0.0
    %912 = vmatpush1.msra.mxu0 0.0
    %913 = vmatprep.subr.mxu0 0.0
    %914 = vmatpush1.msra.mxu0 0.0
    %915 = vmatprep.subr.mxu0 0.0
    %916 = vmatpush1.msra.mxu0 0.0
    %917 = vmatprep.subr.mxu0 0.0
    %918 = vmatpush1.msra.mxu0 0.0
    %919 = vmatprep.subr.mxu0 0.0
    %920 = vmatpush1.msra.mxu0 0.0
    %921 = vmatprep.subr.mxu0 0.0
    %922 = vmatpush1.msra.mxu0 0.0
    %923 = vmatprep.mubr.f32.mxu0 0.0
    %924 = vmatmul.mubr.f32.gmra.mrb[0].mxu0 %v535
    %v925 = vpop.f32.mrb[0].mxu0
    %v926 = vadd.f32 %v857, %v925
    %v927 = vpop.f32.mrb[0].mxu0
    %928 = vmatprep.mubr.f32.mxu0 0.0
    %929 = vmatmul.mubr.f32.gmra.mrb[0].mxu0 %v540
    %v930 = vpop.f32.mrb[0].mxu0
    %v931 = vadd.f32 %v857, %v930
    %v932 = vpop.f32.mrb[0].mxu0
    %933 = vdwg.mxu0
    %v934 = vld [vmem:[#allocation19] sm:$0xff]
    %v935 = vld [vmem:[#allocation19 + $0x8] sm:$0xff]
    %v936 = vld [vmem:[#allocation19 + $0x10] sm:$0xff]
    %v937 = vld [vmem:[#allocation19 + $0x18] sm:$0xff]
    %v938 = vld [vmem:[#allocation19 + $0x20] sm:$0xff]
    %v939 = vld [vmem:[#allocation19 + $0x28] sm:$0xff]
    %v940 = vld [vmem:[#allocation19 + $0x30] sm:$0xff]
    %v941 = vld [vmem:[#allocation19 + $0x38] sm:$0xff]
    %v942 = vld [vmem:[#allocation19 + $0x40] sm:$0xff]
    %v943 = vld [vmem:[#allocation19 + $0x48] sm:$0xff]
    %v944 = vld [vmem:[#allocation19 + $0x50] sm:$0xff]
    %v945 = vld [vmem:[#allocation19 + $0x58] sm:$0xff]
    %v946 = vld [vmem:[#allocation19 + $0x60] sm:$0xff]
    %v947 = vld [vmem:[#allocation19 + $0x68] sm:$0xff]
    %v948 = vld [vmem:[#allocation19 + $0x70] sm:$0xff]
    %v949 = vld [vmem:[#allocation19 + $0x78] sm:$0xff]
    %v950 = vld [vmem:[#allocation20] sm:$0xff]
    %v951 = vld [vmem:[#allocation20 + $0x8] sm:$0xff]
    %v952 = vld [vmem:[#allocation20 + $0x10] sm:$0xff]
    %v953 = vld [vmem:[#allocation20 + $0x18] sm:$0xff]
    %v954 = vld [vmem:[#allocation20 + $0x20] sm:$0xff]
    %v955 = vld [vmem:[#allocation20 + $0x28] sm:$0xff]
    %v956 = vld [vmem:[#allocation20 + $0x30] sm:$0xff]
    %v957 = vld [vmem:[#allocation20 + $0x38] sm:$0xff]
    %v958 = vld [vmem:[#allocation20 + $0x40] sm:$0xff]
    %v959 = vld [vmem:[#allocation20 + $0x48] sm:$0xff]
    %v960 = vld [vmem:[#allocation20 + $0x50] sm:$0xff]
    %v961 = vld [vmem:[#allocation20 + $0x58] sm:$0xff]
    %v962 = vld [vmem:[#allocation20 + $0x60] sm:$0xff]
    %v963 = vld [vmem:[#allocation20 + $0x68] sm:$0xff]
    %v964 = vld [vmem:[#allocation20 + $0x70] sm:$0xff]
    %v965 = vld [vmem:[#allocation20 + $0x78] sm:$0xff]
    %vm966 = vcmask 523264
    %v968 = vsel %vm966, %v926, 0
    %v971 = vsel %vm966, %v931, 0
    %973 = vmatprep.subr.mxu0 %v951
    %974 = vmatpush1.msra.mxu0 %v950
    %975 = vmatprep.subr.mxu0 %v953
    %976 = vmatpush1.msra.mxu0 %v952
    %977 = vmatprep.subr.mxu0 %v955
    %978 = vmatpush1.msra.mxu0 %v954
    %979 = vmatprep.subr.mxu0 %v957
    %980 = vmatpush1.msra.mxu0 %v956
    %981 = vmatprep.subr.mxu0 %v959
    %982 = vmatpush1.msra.mxu0 %v958
    %983 = vmatprep.subr.mxu0 %v961
    %984 = vmatpush1.msra.mxu0 %v960
    %985 = vmatprep.subr.mxu0 %v963
    %986 = vmatpush1.msra.mxu0 %v962
    %987 = vmatprep.subr.mxu0 %v965
    %988 = vmatpush1.msra.mxu0 %v964
    %989 = vmatprep.subr.mxu0 0.0
    %990 = vmatpush1.msra.mxu0 0.0
    %991 = vmatprep.subr.mxu0 0.0
    %992 = vmatpush1.msra.mxu0 0.0
    %993 = vmatprep.subr.mxu0 0.0
    %994 = vmatpush1.msra.mxu0 0.0
    %995 = vmatprep.subr.mxu0 0.0
    %996 = vmatpush1.msra.mxu0 0.0
    %997 = vmatprep.subr.mxu0 0.0
    %998 = vmatpush1.msra.mxu0 0.0
    %999 = vmatprep.subr.mxu0 0.0
    %1000 = vmatpush1.msra.mxu0 0.0
    %1001 = vmatprep.subr.mxu0 0.0
    %1002 = vmatpush1.msra.mxu0 0.0
    %1003 = vmatprep.subr.mxu0 0.0
    %1004 = vmatpush1.msra.mxu0 0.0
    %1005 = vmatprep.subr.mxu0 0.0
    %1006 = vmatpush1.msra.mxu0 0.0
    %1007 = vmatprep.subr.mxu0 0.0
    %1008 = vmatpush1.msra.mxu0 0.0
    %1009 = vmatprep.subr.mxu0 0.0
    %1010 = vmatpush1.msra.mxu0 0.0
    %1011 = vmatprep.subr.mxu0 0.0
    %1012 = vmatpush1.msra.mxu0 0.0
    %1013 = vmatprep.subr.mxu0 0.0
    %1014 = vmatpush1.msra.mxu0 0.0
    %1015 = vmatprep.subr.mxu0 0.0
    %1016 = vmatpush1.msra.mxu0 0.0
    %1017 = vmatprep.subr.mxu0 0.0
    %1018 = vmatpush1.msra.mxu0 0.0
    %1019 = vmatprep.subr.mxu0 0.0
    %1020 = vmatpush1.msra.mxu0 0.0
    %1021 = vmatprep.subr.mxu0 0.0
    %1022 = vmatpush1.msra.mxu0 0.0
    %1023 = vmatprep.subr.mxu0 0.0
    %1024 = vmatpush1.msra.mxu0 0.0
    %1025 = vmatprep.subr.mxu0 0.0
    %1026 = vmatpush1.msra.mxu0 0.0
    %1027 = vmatprep.subr.mxu0 0.0
    %1028 = vmatpush1.msra.mxu0 0.0
    %1029 = vmatprep.subr.mxu0 0.0
    %1030 = vmatpush1.msra.mxu0 0.0
    %1031 = vmatprep.subr.mxu0 0.0
    %1032 = vmatpush1.msra.mxu0 0.0
    %1033 = vmatprep.subr.mxu0 0.0
    %1034 = vmatpush1.msra.mxu0 0.0
    %1035 = vmatprep.subr.mxu0 0.0
    %1036 = vmatpush1.msra.mxu0 0.0
    %1037 = vmatprep.mubr.f32.mxu0 0.0
    %1038 = vmatmul.mubr.f32.gmra.mrb[0].mxu0 %v968
    %v1039 = vpop.f32.mrb[0].mxu0
    %v1040 = vadd.f32 0.0, %v1039
    %v1041 = vpop.f32.mrb[0].mxu0
    %v1042 = vadd.f32 0.0, %v1041
    %1043 = vmatprep.mubr.f32.mxu0 0.0
    %1044 = vmatmul.mubr.f32.gmra.mrb[0].mxu0 %v971
    %v1045 = vpop.f32.mrb[0].mxu0
    %v1046 = vadd.f32 0.0, %v1045
    %v1047 = vpop.f32.mrb[0].mxu0
    %v1048 = vadd.f32 0.0, %v1047
    %1049 = vdwg.mxu0
    %v1051 = vsel %vm966, %v828, 0
    %v1054 = vsel %vm966, %v833, 0
    %1056 = vmatprep.subr.mxu0 %v935
    %1057 = vmatpush1.msra.mxu0 %v934
    %1058 = vmatprep.subr.mxu0 %v937
    %1059 = vmatpush1.msra.mxu0 %v936
    %1060 = vmatprep.subr.mxu0 %v939
    %1061 = vmatpush1.msra.mxu0 %v938
    %1062 = vmatprep.subr.mxu0 %v941
    %1063 = vmatpush1.msra.mxu0 %v940
    %1064 = vmatprep.subr.mxu0 %v943
    %1065 = vmatpush1.msra.mxu0 %v942
    %1066 = vmatprep.subr.mxu0 %v945
    %1067 = vmatpush1.msra.mxu0 %v944
    %1068 = vmatprep.subr.mxu0 %v947
    %1069 = vmatpush1.msra.mxu0 %v946
    %1070 = vmatprep.subr.mxu0 %v949
    %1071 = vmatpush1.msra.mxu0 %v948
    %1072 = vmatprep.subr.mxu0 0.0
    %1073 = vmatpush1.msra.mxu0 0.0
    %1074 = vmatprep.subr.mxu0 0.0
    %1075 = vmatpush1.msra.mxu0 0.0
    %1076 = vmatprep.subr.mxu0 0.0
    %1077 = vmatpush1.msra.mxu0 0.0
    %1078 = vmatprep.subr.mxu0 0.0
    %1079 = vmatpush1.msra.mxu0 0.0
    %1080 = vmatprep.subr.mxu0 0.0
    %1081 = vmatpush1.msra.mxu0 0.0
    %1082 = vmatprep.subr.mxu0 0.0
    %1083 = vmatpush1.msra.mxu0 0.0
    %1084 = vmatprep.subr.mxu0 0.0
    %1085 = vmatpush1.msra.mxu0 0.0
    %1086 = vmatprep.subr.mxu0 0.0
    %1087 = vmatpush1.msra.mxu0 0.0
    %1088 = vmatprep.subr.mxu0 0.0
    %1089 = vmatpush1.msra.mxu0 0.0
    %1090 = vmatprep.subr.mxu0 0.0
    %1091 = vmatpush1.msra.mxu0 0.0
    %1092 = vmatprep.subr.mxu0 0.0
    %1093 = vmatpush1.msra.mxu0 0.0
    %1094 = vmatprep.subr.mxu0 0.0
    %1095 = vmatpush1.msra.mxu0 0.0
    %1096 = vmatprep.subr.mxu0 0.0
    %1097 = vmatpush1.msra.mxu0 0.0
    %1098 = vmatprep.subr.mxu0 0.0
    %1099 = vmatpush1.msra.mxu0 0.0
    %1100 = vmatprep.subr.mxu0 0.0
    %1101 = vmatpush1.msra.mxu0 0.0
    %1102 = vmatprep.subr.mxu0 0.0
    %1103 = vmatpush1.msra.mxu0 0.0
    %1104 = vmatprep.subr.mxu0 0.0
    %1105 = vmatpush1.msra.mxu0 0.0
    %1106 = vmatprep.subr.mxu0 0.0
    %1107 = vmatpush1.msra.mxu0 0.0
    %1108 = vmatprep.subr.mxu0 0.0
    %1109 = vmatpush1.msra.mxu0 0.0
    %1110 = vmatprep.subr.mxu0 0.0
    %1111 = vmatpush1.msra.mxu0 0.0
    %1112 = vmatprep.subr.mxu0 0.0
    %1113 = vmatpush1.msra.mxu0 0.0
    %1114 = vmatprep.subr.mxu0 0.0
    %1115 = vmatpush1.msra.mxu0 0.0
    %1116 = vmatprep.subr.mxu0 0.0
    %1117 = vmatpush1.msra.mxu0 0.0
    %1118 = vmatprep.subr.mxu0 0.0
    %1119 = vmatpush1.msra.mxu0 0.0
    %1120 = vmatprep.mubr.f32.mxu0 0.0
    %1121 = vmatmul.mubr.f32.gmra.mrb[0].mxu0 %v1051
    %v1122 = vpop.f32.mrb[0].mxu0
    %v1123 = vadd.f32 %v1040, %v1122
    %v1124 = vpop.f32.mrb[0].mxu0
    %v1125 = vadd.f32 %v1042, %v1124
    %1126 = vmatprep.mubr.f32.mxu0 0.0
    %1127 = vmatmul.mubr.f32.gmra.mrb[0].mxu0 %v1054
    %v1128 = vpop.f32.mrb[0].mxu0
    %v1129 = vadd.f32 %v1046, %v1128
    %v1130 = vpop.f32.mrb[0].mxu0
    %v1131 = vadd.f32 %v1048, %v1130
    %1132 = vdwg.mxu0
    %v1133 = vld [vmem:[%s16] sm:$0x3]
    %v1135 = vlaneseq
    %v1136 = vshrl.u32 %v1135, 7
    %v1137 = vsub.s32 0, %v1136
    %v1138 = vrot.slane %v1133, %v1137
    %v1139 = vlaneseq
    %v1140 = vshrl.u32 %v1139, 7
    %v1141 = vsub.s32 1, %v1140
    %v1142 = vrot.slane %v1133, %v1141
    %v1145 = vadd.f32 %v1123, %v1138
    %v1146 = vadd.f32 %v1125, %v1142
    %v1147 = vadd.f32 %v1129, %v1138
    %v1148 = vadd.f32 %v1131, %v1142
    %1149 = vst [vmem:[#allocation22] sm:$0xff] %v1145
    %1150 = vst [vmem:[#allocation22 + $0x8] sm:$0xff] %v1146
    %1151 = vst [vmem:[#allocation22 + $0x10] sm:$0xff] %v1147
    %1152 = vst [vmem:[#allocation22 + $0x18] sm:$0xff] %v1148
    // Predicated region
    $region118: #{cor_forward.1} parent=1 // pred_check
      _
    $region119: #{cor_forward.1} parent=1 // pred_check_branch
      %1154 = sbr.rel (0) target = $region121
    $region120: #{cor_forward.1} parent=1 // pred_region
      %s1156 = ssub.s32 512, 512
      %1157 = vsyncadd [#allocation4], %s1156
      %s1158 = sshll.u32 [#allocation22], 4
      %s1159 = int_to_ptr.vmem [resolvable:$true] %s1158
      %1164 = dma.vmem_to_hbm [thread:$0]  %s1159, 512, %s17, [#allocation4], 256, 256, 16
    $region121: #{cor_forward.1} parent=1 // pred_fallthru
      _
    // Predicated region
    $region122: #{cor_forward.1} parent=1 // pred_check
      _
    $region123: #{cor_forward.1} parent=1 // pred_check_branch
      %1166 = sbr.rel (0) target = $region125
    $region124: #{cor_forward.1} parent=1 // pred_region
      _
    $region125: #{cor_forward.1} parent=1 // pred_fallthru
      _
    // Predicated region
    $region126: #{cor_forward.1} parent=1 // pred_check
      _
    $region127: #{cor_forward.1} parent=1 // pred_check_branch
      %1168 = sbr.rel (0) target = $region129
    $region128: #{cor_forward.1} parent=1 // pred_region
      %1169 = dma.done [#allocation4], 512
    $region129: #{cor_forward.1} parent=1 // pred_fallthru
      _
    // Predicated region
    $region130: #{cor_forward.1} parent=1 // pred_check
      _
    $region131: #{cor_forward.1} parent=1 // pred_check_branch
      %1171 = sbr.rel (0) target = $region133
    $region132: #{cor_forward.1} parent=1 // pred_region
      _
    $region133: #{cor_forward.1} parent=1 // pred_fallthru
      _
    %1172 = vsyncpa [#allocation3], 1
    %1173 = vsyncpa [#allocation6], 1
    %1174 = vsyncpa [#allocation9], 1
    %1175 = vsyncpa [#allocation12], 1
    %1176 = vsyncpa [#allocation15], 1
    %1177 = vsyncpa [#allocation18], 1
    %1178 = vsyncpa [#allocation21], 1
    %1179 = vsyncpa [#allocation4], 1

</llo_original>
